<compile_context>
chip_gen: v7x
topology: tpu7x:2x2x1
jax: 0.10.0
libtpu: 0.0.40
codegen_flags: <defaults>
</compile_context>

<pallas_src>
import math
import functools

import jax
import jax.numpy as jnp
from jax import lax
from jax.experimental import pallas as pl
from jax.experimental.pallas import tpu as pltpu


def _attention_kernel(x_ref, wq_ref, wk_ref, wv_ref, wo_ref,
                      bq_ref, bk_ref, bv_ref, bo_ref, o_ref, ctx_ref,
                      *, num_heads, head_dim):
    """Full multi-head self-attention for one batch element (one grid step).

    x_ref   : (S, E)  bf16 input for this batch element (batch dim squeezed)
    w*_ref  : (E, E)  bf16 projection weights (right-multiply layout)
    b*_ref  : (1, E)  f32 biases
    o_ref   : (S, E)  f32 output for this batch element
    ctx_ref : (S, E)  f32 VMEM scratch holding per-head context columns
    """
    Dh = head_dim
    scale = 1.0 / math.sqrt(Dh)

    x = x_ref[...]                                                   # (S, E) bf16

    # Q/K/V projections: three (S,E)@(E,E) bf16 MXU matmuls with f32 accumulate.
    q = jnp.dot(x, wq_ref[...], preferred_element_type=jnp.float32) + bq_ref[...]
    k = jnp.dot(x, wk_ref[...], preferred_element_type=jnp.float32) + bk_ref[...]
    v = jnp.dot(x, wv_ref[...], preferred_element_type=jnp.float32) + bv_ref[...]

    # Per-head attention; each head writes its own Dh-wide column slice of the
    # VMEM ctx scratch (disjoint writes -> no read-modify-write of the output).
    # num_heads is small and static, so a Python unroll keeps codegen simple.
    for h in range(num_heads):
        lo = h * Dh
        qh = (q[:, lo:lo + Dh] * scale).astype(jnp.bfloat16)        # (S, Dh)
        kh = k[:, lo:lo + Dh].astype(jnp.bfloat16)                  # (S, Dh)
        vh = v[:, lo:lo + Dh].astype(jnp.bfloat16)                  # (S, Dh)

        # Scores: contract head_dim directly (no transpose), f32 accumulate.
        s = lax.dot_general(qh, kh, (((1,), (1,)), ((), ())),
                            preferred_element_type=jnp.float32)     # (S, S)

        # Numerically stable softmax in f32; EUP reciprocal for the normalizer.
        s = s - jnp.max(s, axis=-1, keepdims=True)
        p = jnp.exp(s)
        p = p * pl.reciprocal(jnp.sum(p, axis=-1, keepdims=True), approx=True)

        ctx_ref[:, lo:lo + Dh] = jnp.dot(p.astype(jnp.bfloat16), vh,
                                         preferred_element_type=jnp.float32)

    # Single hoisted output projection over all heads: one (S,E)@(E,E), K=E.
    ctx = ctx_ref[...].astype(jnp.bfloat16)
    o_ref[...] = (jnp.dot(ctx, wo_ref[...], preferred_element_type=jnp.float32)
                  + bo_ref[...])


def simple_attention_block(x_sbe, params, *, num_heads):
    """x_sbe: [seq_len, batch, embed] float32 (PyTorch layout). Returns same layout."""
    S, B, E = x_sbe.shape
    assert E % num_heads == 0
    head_dim = E // num_heads

    # One-time layout / precision prep (plain XLA, outside the kernel):
    #   * (S,B,E) -> (B,S,E) so each grid step gets a dense (S,E) tile.
    #   * bf16 matmul operands; biases stay f32 (added post-accumulation).
    x_bse = jnp.transpose(x_sbe, (1, 0, 2)).astype(jnp.bfloat16)
    wq = params["wq"].astype(jnp.bfloat16)
    wk = params["wk"].astype(jnp.bfloat16)
    wv = params["wv"].astype(jnp.bfloat16)
    wo = params["wo"].astype(jnp.bfloat16)
    bq = params["bq"].reshape(1, E)
    bk = params["bk"].reshape(1, E)
    bv = params["bv"].reshape(1, E)
    bo = params["bo"].reshape(1, E)

    kernel = functools.partial(_attention_kernel,
                               num_heads=num_heads, head_dim=head_dim)

    out_bse = pl.pallas_call(
        kernel,
        out_shape=jax.ShapeDtypeStruct((B, S, E), jnp.float32),
        grid=(B,),
        in_specs=[
            pl.BlockSpec((None, S, E), lambda b: (b, 0, 0)),   # x: one batch elem
            pl.BlockSpec((E, E), lambda b: (0, 0)),            # Wq (resident)
            pl.BlockSpec((E, E), lambda b: (0, 0)),            # Wk (resident)
            pl.BlockSpec((E, E), lambda b: (0, 0)),            # Wv (resident)
            pl.BlockSpec((E, E), lambda b: (0, 0)),            # Wo (resident)
            pl.BlockSpec((1, E), lambda b: (0, 0)),            # bq
            pl.BlockSpec((1, E), lambda b: (0, 0)),            # bk
            pl.BlockSpec((1, E), lambda b: (0, 0)),            # bv
            pl.BlockSpec((1, E), lambda b: (0, 0)),            # bo
        ],
        out_specs=pl.BlockSpec((None, S, E), lambda b: (b, 0, 0)),
        scratch_shapes=[pltpu.VMEM((S, E), jnp.float32)],      # per-head ctx columns
        compiler_params=pltpu.CompilerParams(
            dimension_semantics=("parallel",),                 # batch -> megacore on v7x
            vmem_limit_bytes=32 * 1024 * 1024),
    )(x_bse, wq, wk, wv, wo, bq, bk, bv, bo)

    # Back to PyTorch layout [S, B, E]; dropout is identity in eval mode.
    return jnp.transpose(out_bse, (1, 0, 2))


def _reference(x_sbe, params, *, num_heads):
    """Pure-JAX f32 reference of nn.MultiheadAttention self-attention (eval)."""
    S, B, E = x_sbe.shape
    Dh = E // num_heads
    x = jnp.transpose(x_sbe, (1, 0, 2))  # (B, S, E)
    q = x @ params["wq"] + params["bq"]
    k = x @ params["wk"] + params["bk"]
    v = x @ params["wv"] + params["bv"]

    def split(t):  # (B, S, E) -> (B, H, S, Dh)
        return jnp.transpose(t.reshape(B, S, num_heads, Dh), (0, 2, 1, 3))

    qh, kh, vh = split(q), split(k), split(v)
    s = jnp.einsum("bhqd,bhkd->bhqk", qh, kh) / math.sqrt(Dh)
    p = jax.nn.softmax(s, axis=-1)
    ctx = jnp.einsum("bhqk,bhkd->bhqd", p, vh)
    ctx = jnp.transpose(ctx, (0, 2, 1, 3)).reshape(B, S, E)
    out = ctx @ params["wo"] + params["bo"]
    return jnp.transpose(out, (1, 0, 2))


def init_params(key, embed_dim):
    """Deterministic params. Weights stored in right-multiply layout (= torch W.T)."""
    ks = jax.random.split(key, 8)
    lim = 1.0 / math.sqrt(embed_dim)

    def w(k):
        return jax.random.uniform(k, (embed_dim, embed_dim), jnp.float32, -lim, lim)

    def b(k):
        return jax.random.uniform(k, (embed_dim,), jnp.float32, -lim, lim)

    return {
        "wq": w(ks[0]), "wk": w(ks[1]), "wv": w(ks[2]), "wo": w(ks[3]),
        "bq": b(ks[4]), "bk": b(ks[5]), "bv": b(ks[6]), "bo": b(ks[7]),
    }


if __name__ == "__main__":
    seq_len, batch, embed_dim, num_heads = 8, 2, 32, 4

    key = jax.random.PRNGKey(0)
    kx, kp = jax.random.split(key)
    x = jax.random.normal(kx, (seq_len, batch, embed_dim), jnp.float32)
    params = init_params(kp, embed_dim)

    out = simple_attention_block(x, params, num_heads=num_heads)
    out = jax.block_until_ready(out)

    ref = _reference(x, params, num_heads=num_heads)
    assert out.shape == (seq_len, batch, embed_dim)
    # Tolerance accounts for bf16 matmul operands (x, weights, probs, ctx) and
    # the approximate (EUP) reciprocal in the softmax normalizer.
    assert jnp.allclose(out, ref, atol=3e-2, rtol=3e-2), "mismatch vs reference"

    print("KERNEL_OK")
</pallas_src>

<mosaic_0001>
module attributes {stable_mosaic.version = 11 : i64} {
  func.func @_attention_kernel(%arg0: i32, %arg1: memref<1x8x32xbf16, #tpu.memory_space<vmem>>, %arg2: memref<32x32xbf16, #tpu.memory_space<vmem>>, %arg3: memref<32x32xbf16, #tpu.memory_space<vmem>>, %arg4: memref<32x32xbf16, #tpu.memory_space<vmem>>, %arg5: memref<32x32xbf16, #tpu.memory_space<vmem>>, %arg6: memref<1x32xf32, #tpu.memory_space<vmem>>, %arg7: memref<1x32xf32, #tpu.memory_space<vmem>>, %arg8: memref<1x32xf32, #tpu.memory_space<vmem>>, %arg9: memref<1x32xf32, #tpu.memory_space<vmem>>, %arg10: memref<1x8x32xf32, #tpu.memory_space<vmem>>, %arg11: memref<8x32xf32, #tpu.memory_space<vmem>>) attributes {dimension_semantics = [#tpu.dimension_semantics<parallel>], iteration_bounds = array<i64: 2>, scalar_prefetch = 0 : i64, scratch_operands = 1 : i64, tpu.core_type = #tpu.core_type<tc>, window_params = [{transform_indices = @transform_0, window_bounds = array<i64: 1, 8, 32>}, {pipeline_mode = #tpu.pipeline_mode<synchronous>, transform_indices = @transform_1, window_bounds = array<i64: 32, 32>}, {pipeline_mode = #tpu.pipeline_mode<synchronous>, transform_indices = @transform_2, window_bounds = array<i64: 32, 32>}, {pipeline_mode = #tpu.pipeline_mode<synchronous>, transform_indices = @transform_3, window_bounds = array<i64: 32, 32>}, {pipeline_mode = #tpu.pipeline_mode<synchronous>, transform_indices = @transform_4, window_bounds = array<i64: 32, 32>}, {pipeline_mode = #tpu.pipeline_mode<synchronous>, transform_indices = @transform_5, window_bounds = array<i64: 1, 32>}, {pipeline_mode = #tpu.pipeline_mode<synchronous>, transform_indices = @transform_6, window_bounds = array<i64: 1, 32>}, {pipeline_mode = #tpu.pipeline_mode<synchronous>, transform_indices = @transform_7, window_bounds = array<i64: 1, 32>}, {pipeline_mode = #tpu.pipeline_mode<synchronous>, transform_indices = @transform_8, window_bounds = array<i64: 1, 32>}, {transform_indices = @transform_9, window_bounds = array<i64: 1, 8, 32>}]} {
    %c0 = arith.constant 0 : index
    %c0_0 = arith.constant 0 : index
    %c0_1 = arith.constant 0 : index
    %0 = vector.load %arg1[%c0, %c0_0, %c0_1] : memref<1x8x32xbf16, #tpu.memory_space<vmem>>, vector<1x8x32xbf16>
    %1 = vector.shape_cast %0 : vector<1x8x32xbf16> to vector<8x32xbf16>
    %c0_2 = arith.constant 0 : index
    %c0_3 = arith.constant 0 : index
    %2 = vector.load %arg2[%c0_2, %c0_3] : memref<32x32xbf16, #tpu.memory_space<vmem>>, vector<32x32xbf16>
    %cst = arith.constant dense<0.000000e+00> : vector<8x32xf32>
    %3 = tpu.matmul %1, %2, %cst {dimension_numbers = #tpu.dot_dimension_numbers<[1], [0], [0], [1], [0, 0, 1, 1], [], []>} : vector<8x32xbf16>, vector<32x32xbf16>, vector<8x32xf32> -> vector<8x32xf32>
    %c0_4 = arith.constant 0 : index
    %c0_5 = arith.constant 0 : index
    %4 = vector.load %arg6[%c0_4, %c0_5] : memref<1x32xf32, #tpu.memory_space<vmem>>, vector<1x32xf32>
    %5 = vector.broadcast %4 : vector<1x32xf32> to vector<8x32xf32>
    %6 = arith.addf %3, %5 : vector<8x32xf32>
    %c0_6 = arith.constant 0 : index
    %c0_7 = arith.constant 0 : index
    %7 = vector.load %arg3[%c0_6, %c0_7] : memref<32x32xbf16, #tpu.memory_space<vmem>>, vector<32x32xbf16>
    %cst_8 = arith.constant dense<0.000000e+00> : vector<8x32xf32>
    %8 = tpu.matmul %1, %7, %cst_8 {dimension_numbers = #tpu.dot_dimension_numbers<[1], [0], [0], [1], [0, 0, 1, 1], [], []>} : vector<8x32xbf16>, vector<32x32xbf16>, vector<8x32xf32> -> vector<8x32xf32>
    %c0_9 = arith.constant 0 : index
    %c0_10 = arith.constant 0 : index
    %9 = vector.load %arg7[%c0_9, %c0_10] : memref<1x32xf32, #tpu.memory_space<vmem>>, vector<1x32xf32>
    %10 = vector.broadcast %9 : vector<1x32xf32> to vector<8x32xf32>
    %11 = arith.addf %8, %10 : vector<8x32xf32>
    %c0_11 = arith.constant 0 : index
    %c0_12 = arith.constant 0 : index
    %12 = vector.load %arg4[%c0_11, %c0_12] : memref<32x32xbf16, #tpu.memory_space<vmem>>, vector<32x32xbf16>
    %cst_13 = arith.constant dense<0.000000e+00> : vector<8x32xf32>
    %13 = tpu.matmul %1, %12, %cst_13 {dimension_numbers = #tpu.dot_dimension_numbers<[1], [0], [0], [1], [0, 0, 1, 1], [], []>} : vector<8x32xbf16>, vector<32x32xbf16>, vector<8x32xf32> -> vector<8x32xf32>
    %c0_14 = arith.constant 0 : index
    %c0_15 = arith.constant 0 : index
    %14 = vector.load %arg8[%c0_14, %c0_15] : memref<1x32xf32, #tpu.memory_space<vmem>>, vector<1x32xf32>
    %15 = vector.broadcast %14 : vector<1x32xf32> to vector<8x32xf32>
    %16 = arith.addf %13, %15 : vector<8x32xf32>
    %17 = vector.extract_strided_slice %6 {offsets = [0, 0], sizes = [8, 8], strides = [1, 1]} : vector<8x32xf32> to vector<8x8xf32>
    %cst_16 = arith.constant 0.353553385 : f32
    %18 = vector.broadcast %cst_16 : f32 to vector<8x8xf32>
    %19 = arith.mulf %17, %18 : vector<8x8xf32>
    %20 = arith.truncf %19 : vector<8x8xf32> to vector<8x8xbf16>
    %21 = vector.extract_strided_slice %11 {offsets = [0, 0], sizes = [8, 8], strides = [1, 1]} : vector<8x32xf32> to vector<8x8xf32>
    %22 = arith.truncf %21 : vector<8x8xf32> to vector<8x8xbf16>
    %23 = vector.extract_strided_slice %16 {offsets = [0, 0], sizes = [8, 8], strides = [1, 1]} : vector<8x32xf32> to vector<8x8xf32>
    %24 = arith.truncf %23 : vector<8x8xf32> to vector<8x8xbf16>
    %cst_17 = arith.constant dense<0.000000e+00> : vector<8x8xf32>
    %25 = tpu.matmul %20, %22, %cst_17 {dimension_numbers = #tpu.dot_dimension_numbers<[1], [1], [0], [0], [0, 0, 1, 0], [], []>} : vector<8x8xbf16>, vector<8x8xbf16>, vector<8x8xf32> -> vector<8x8xf32>
    %cst_18 = arith.constant dense<0xFF800000> : vector<8xf32>
    %26 = vector.multi_reduction <maximumf>, %25, %cst_18 [1] : vector<8x8xf32> to vector<8xf32>
    %27 = vector.shape_cast %26 : vector<8xf32> to vector<8x1xf32>
    %28 = vector.broadcast %27 : vector<8x1xf32> to vector<8x8xf32>
    %29 = arith.subf %25, %28 : vector<8x8xf32>
    %30 = math.exp %29 : vector<8x8xf32>
    %cst_19 = arith.constant dense<0.000000e+00> : vector<8xf32>
    %31 = vector.multi_reduction <add>, %30, %cst_19 [1] : vector<8x8xf32> to vector<8xf32>
    %32 = vector.shape_cast %31 : vector<8xf32> to vector<8x1xf32>
    %33 = tpu.reciprocal %32 {approx = true} : vector<8x1xf32> -> vector<8x1xf32>
    %34 = vector.broadcast %33 : vector<8x1xf32> to vector<8x8xf32>
    %35 = arith.mulf %30, %34 : vector<8x8xf32>
    %36 = arith.truncf %35 : vector<8x8xf32> to vector<8x8xbf16>
    %cst_20 = arith.constant dense<0.000000e+00> : vector<8x8xf32>
    %37 = tpu.matmul %36, %24, %cst_20 {dimension_numbers = #tpu.dot_dimension_numbers<[1], [0], [0], [1], [0, 0, 1, 1], [], []>} : vector<8x8xbf16>, vector<8x8xbf16>, vector<8x8xf32> -> vector<8x8xf32>
    %c0_21 = arith.constant 0 : index
    %c0_22 = arith.constant 0 : index
    %38 = vector.load %arg11[%c0_21, %c0_22] : memref<8x32xf32, #tpu.memory_space<vmem>>, vector<8x8xf32>
    tpu.vector_store %arg11[%c0_21, %c0_22], %37 {strides = array<i32>} : memref<8x32xf32, #tpu.memory_space<vmem>>, vector<8x8xf32>,
    %39 = vector.extract_strided_slice %6 {offsets = [0, 8], sizes = [8, 8], strides = [1, 1]} : vector<8x32xf32> to vector<8x8xf32>
    %cst_23 = arith.constant 0.353553385 : f32
    %40 = vector.broadcast %cst_23 : f32 to vector<8x8xf32>
    %41 = arith.mulf %39, %40 : vector<8x8xf32>
    %42 = arith.truncf %41 : vector<8x8xf32> to vector<8x8xbf16>
    %43 = vector.extract_strided_slice %11 {offsets = [0, 8], sizes = [8, 8], strides = [1, 1]} : vector<8x32xf32> to vector<8x8xf32>
    %44 = arith.truncf %43 : vector<8x8xf32> to vector<8x8xbf16>
    %45 = vector.extract_strided_slice %16 {offsets = [0, 8], sizes = [8, 8], strides = [1, 1]} : vector<8x32xf32> to vector<8x8xf32>
    %46 = arith.truncf %45 : vector<8x8xf32> to vector<8x8xbf16>
    %cst_24 = arith.constant dense<0.000000e+00> : vector<8x8xf32>
    %47 = tpu.matmul %42, %44, %cst_24 {dimension_numbers = #tpu.dot_dimension_numbers<[1], [1], [0], [0], [0, 0, 1, 0], [], []>} : vector<8x8xbf16>, vector<8x8xbf16>, vector<8x8xf32> -> vector<8x8xf32>
    %cst_25 = arith.constant dense<0xFF800000> : vector<8xf32>
    %48 = vector.multi_reduction <maximumf>, %47, %cst_25 [1] : vector<8x8xf32> to vector<8xf32>
    %49 = vector.shape_cast %48 : vector<8xf32> to vector<8x1xf32>
    %50 = vector.broadcast %49 : vector<8x1xf32> to vector<8x8xf32>
    %51 = arith.subf %47, %50 : vector<8x8xf32>
    %52 = math.exp %51 : vector<8x8xf32>
    %cst_26 = arith.constant dense<0.000000e+00> : vector<8xf32>
    %53 = vector.multi_reduction <add>, %52, %cst_26 [1] : vector<8x8xf32> to vector<8xf32>
    %54 = vector.shape_cast %53 : vector<8xf32> to vector<8x1xf32>
    %55 = tpu.reciprocal %54 {approx = true} : vector<8x1xf32> -> vector<8x1xf32>
    %56 = vector.broadcast %55 : vector<8x1xf32> to vector<8x8xf32>
    %57 = arith.mulf %52, %56 : vector<8x8xf32>
    %58 = arith.truncf %57 : vector<8x8xf32> to vector<8x8xbf16>
    %cst_27 = arith.constant dense<0.000000e+00> : vector<8x8xf32>
    %59 = tpu.matmul %58, %46, %cst_27 {dimension_numbers = #tpu.dot_dimension_numbers<[1], [0], [0], [1], [0, 0, 1, 1], [], []>} : vector<8x8xbf16>, vector<8x8xbf16>, vector<8x8xf32> -> vector<8x8xf32>
    %c0_28 = arith.constant 0 : index
    %c8 = arith.constant 8 : index
    %60 = vector.load %arg11[%c0_28, %c8] : memref<8x32xf32, #tpu.memory_space<vmem>>, vector<8x8xf32>
    tpu.vector_store %arg11[%c0_28, %c8], %59 {strides = array<i32>} : memref<8x32xf32, #tpu.memory_space<vmem>>, vector<8x8xf32>,
    %61 = vector.extract_strided_slice %6 {offsets = [0, 16], sizes = [8, 8], strides = [1, 1]} : vector<8x32xf32> to vector<8x8xf32>
    %cst_29 = arith.constant 0.353553385 : f32
    %62 = vector.broadcast %cst_29 : f32 to vector<8x8xf32>
    %63 = arith.mulf %61, %62 : vector<8x8xf32>
    %64 = arith.truncf %63 : vector<8x8xf32> to vector<8x8xbf16>
    %65 = vector.extract_strided_slice %11 {offsets = [0, 16], sizes = [8, 8], strides = [1, 1]} : vector<8x32xf32> to vector<8x8xf32>
    %66 = arith.truncf %65 : vector<8x8xf32> to vector<8x8xbf16>
    %67 = vector.extract_strided_slice %16 {offsets = [0, 16], sizes = [8, 8], strides = [1, 1]} : vector<8x32xf32> to vector<8x8xf32>
    %68 = arith.truncf %67 : vector<8x8xf32> to vector<8x8xbf16>
    %cst_30 = arith.constant dense<0.000000e+00> : vector<8x8xf32>
    %69 = tpu.matmul %64, %66, %cst_30 {dimension_numbers = #tpu.dot_dimension_numbers<[1], [1], [0], [0], [0, 0, 1, 0], [], []>} : vector<8x8xbf16>, vector<8x8xbf16>, vector<8x8xf32> -> vector<8x8xf32>
    %cst_31 = arith.constant dense<0xFF800000> : vector<8xf32>
    %70 = vector.multi_reduction <maximumf>, %69, %cst_31 [1] : vector<8x8xf32> to vector<8xf32>
    %71 = vector.shape_cast %70 : vector<8xf32> to vector<8x1xf32>
    %72 = vector.broadcast %71 : vector<8x1xf32> to vector<8x8xf32>
    %73 = arith.subf %69, %72 : vector<8x8xf32>
    %74 = math.exp %73 : vector<8x8xf32>
    %cst_32 = arith.constant dense<0.000000e+00> : vector<8xf32>
    %75 = vector.multi_reduction <add>, %74, %cst_32 [1] : vector<8x8xf32> to vector<8xf32>
    %76 = vector.shape_cast %75 : vector<8xf32> to vector<8x1xf32>
    %77 = tpu.reciprocal %76 {approx = true} : vector<8x1xf32> -> vector<8x1xf32>
    %78 = vector.broadcast %77 : vector<8x1xf32> to vector<8x8xf32>
    %79 = arith.mulf %74, %78 : vector<8x8xf32>
    %80 = arith.truncf %79 : vector<8x8xf32> to vector<8x8xbf16>
    %cst_33 = arith.constant dense<0.000000e+00> : vector<8x8xf32>
    %81 = tpu.matmul %80, %68, %cst_33 {dimension_numbers = #tpu.dot_dimension_numbers<[1], [0], [0], [1], [0, 0, 1, 1], [], []>} : vector<8x8xbf16>, vector<8x8xbf16>, vector<8x8xf32> -> vector<8x8xf32>
    %c0_34 = arith.constant 0 : index
    %c16 = arith.constant 16 : index
    %82 = vector.load %arg11[%c0_34, %c16] : memref<8x32xf32, #tpu.memory_space<vmem>>, vector<8x8xf32>
    tpu.vector_store %arg11[%c0_34, %c16], %81 {strides = array<i32>} : memref<8x32xf32, #tpu.memory_space<vmem>>, vector<8x8xf32>,
    %83 = vector.extract_strided_slice %6 {offsets = [0, 24], sizes = [8, 8], strides = [1, 1]} : vector<8x32xf32> to vector<8x8xf32>
    %cst_35 = arith.constant 0.353553385 : f32
    %84 = vector.broadcast %cst_35 : f32 to vector<8x8xf32>
    %85 = arith.mulf %83, %84 : vector<8x8xf32>
    %86 = arith.truncf %85 : vector<8x8xf32> to vector<8x8xbf16>
    %87 = vector.extract_strided_slice %11 {offsets = [0, 24], sizes = [8, 8], strides = [1, 1]} : vector<8x32xf32> to vector<8x8xf32>
    %88 = arith.truncf %87 : vector<8x8xf32> to vector<8x8xbf16>
    %89 = vector.extract_strided_slice %16 {offsets = [0, 24], sizes = [8, 8], strides = [1, 1]} : vector<8x32xf32> to vector<8x8xf32>
    %90 = arith.truncf %89 : vector<8x8xf32> to vector<8x8xbf16>
    %cst_36 = arith.constant dense<0.000000e+00> : vector<8x8xf32>
    %91 = tpu.matmul %86, %88, %cst_36 {dimension_numbers = #tpu.dot_dimension_numbers<[1], [1], [0], [0], [0, 0, 1, 0], [], []>} : vector<8x8xbf16>, vector<8x8xbf16>, vector<8x8xf32> -> vector<8x8xf32>
    %cst_37 = arith.constant dense<0xFF800000> : vector<8xf32>
    %92 = vector.multi_reduction <maximumf>, %91, %cst_37 [1] : vector<8x8xf32> to vector<8xf32>
    %93 = vector.shape_cast %92 : vector<8xf32> to vector<8x1xf32>
    %94 = vector.broadcast %93 : vector<8x1xf32> to vector<8x8xf32>
    %95 = arith.subf %91, %94 : vector<8x8xf32>
    %96 = math.exp %95 : vector<8x8xf32>
    %cst_38 = arith.constant dense<0.000000e+00> : vector<8xf32>
    %97 = vector.multi_reduction <add>, %96, %cst_38 [1] : vector<8x8xf32> to vector<8xf32>
    %98 = vector.shape_cast %97 : vector<8xf32> to vector<8x1xf32>
    %99 = tpu.reciprocal %98 {approx = true} : vector<8x1xf32> -> vector<8x1xf32>
    %100 = vector.broadcast %99 : vector<8x1xf32> to vector<8x8xf32>
    %101 = arith.mulf %96, %100 : vector<8x8xf32>
    %102 = arith.truncf %101 : vector<8x8xf32> to vector<8x8xbf16>
    %cst_39 = arith.constant dense<0.000000e+00> : vector<8x8xf32>
    %103 = tpu.matmul %102, %90, %cst_39 {dimension_numbers = #tpu.dot_dimension_numbers<[1], [0], [0], [1], [0, 0, 1, 1], [], []>} : vector<8x8xbf16>, vector<8x8xbf16>, vector<8x8xf32> -> vector<8x8xf32>
    %c0_40 = arith.constant 0 : index
    %c24 = arith.constant 24 : index
    %104 = vector.load %arg11[%c0_40, %c24] : memref<8x32xf32, #tpu.memory_space<vmem>>, vector<8x8xf32>
    tpu.vector_store %arg11[%c0_40, %c24], %103 {strides = array<i32>} : memref<8x32xf32, #tpu.memory_space<vmem>>, vector<8x8xf32>,
    %c0_41 = arith.constant 0 : index
    %c0_42 = arith.constant 0 : index
    %105 = vector.load %arg11[%c0_41, %c0_42] : memref<8x32xf32, #tpu.memory_space<vmem>>, vector<8x32xf32>
    %106 = arith.truncf %105 : vector<8x32xf32> to vector<8x32xbf16>
    %c0_43 = arith.constant 0 : index
    %c0_44 = arith.constant 0 : index
    %107 = vector.load %arg5[%c0_43, %c0_44] : memref<32x32xbf16, #tpu.memory_space<vmem>>, vector<32x32xbf16>
    %cst_45 = arith.constant dense<0.000000e+00> : vector<8x32xf32>
    %108 = tpu.matmul %106, %107, %cst_45 {dimension_numbers = #tpu.dot_dimension_numbers<[1], [0], [0], [1], [0, 0, 1, 1], [], []>} : vector<8x32xbf16>, vector<32x32xbf16>, vector<8x32xf32> -> vector<8x32xf32>
    %c0_46 = arith.constant 0 : index
    %c0_47 = arith.constant 0 : index
    %109 = vector.load %arg9[%c0_46, %c0_47] : memref<1x32xf32, #tpu.memory_space<vmem>>, vector<1x32xf32>
    %110 = vector.broadcast %109 : vector<1x32xf32> to vector<8x32xf32>
    %111 = arith.addf %108, %110 : vector<8x32xf32>
    %c0_48 = arith.constant 0 : index
    %c0_49 = arith.constant 0 : index
    %c0_50 = arith.constant 0 : index
    %112 = vector.load %arg10[%c0_48, %c0_49, %c0_50] : memref<1x8x32xf32, #tpu.memory_space<vmem>>, vector<1x8x32xf32>
    %113 = vector.shape_cast %112 : vector<1x8x32xf32> to vector<8x32xf32>
    %114 = vector.shape_cast %111 : vector<8x32xf32> to vector<1x8x32xf32>
    tpu.vector_store %arg10[%c0_48, %c0_49, %c0_50], %114 {strides = array<i32>} : memref<1x8x32xf32, #tpu.memory_space<vmem>>, vector<1x8x32xf32>,
    return
  }
  func.func @transform_0(%arg0: i32) -> (i32, i32, i32) {
    %c0_i32 = arith.constant 0 : i32
    %c0_i32_0 = arith.constant 0 : i32
    %c0_i32_1 = arith.constant 0 : i32
    return %arg0, %c0_i32, %c0_i32_0 : i32, i32, i32
  }
  func.func @transform_1(%arg0: i32) -> (i32, i32) {
    %c0_i32 = arith.constant 0 : i32
    %c0_i32_0 = arith.constant 0 : i32
    %c0_i32_1 = arith.constant 0 : i32
    return %c0_i32, %c0_i32_0 : i32, i32
  }
  func.func @transform_2(%arg0: i32) -> (i32, i32) {
    %c0_i32 = arith.constant 0 : i32
    %c0_i32_0 = arith.constant 0 : i32
    %c0_i32_1 = arith.constant 0 : i32
    return %c0_i32, %c0_i32_0 : i32, i32
  }
  func.func @transform_3(%arg0: i32) -> (i32, i32) {
    %c0_i32 = arith.constant 0 : i32
    %c0_i32_0 = arith.constant 0 : i32
    %c0_i32_1 = arith.constant 0 : i32
    return %c0_i32, %c0_i32_0 : i32, i32
  }
  func.func @transform_4(%arg0: i32) -> (i32, i32) {
    %c0_i32 = arith.constant 0 : i32
    %c0_i32_0 = arith.constant 0 : i32
    %c0_i32_1 = arith.constant 0 : i32
    return %c0_i32, %c0_i32_0 : i32, i32
  }
  func.func @transform_5(%arg0: i32) -> (i32, i32) {
    %c0_i32 = arith.constant 0 : i32
    %c0_i32_0 = arith.constant 0 : i32
    %c0_i32_1 = arith.constant 0 : i32
    return %c0_i32, %c0_i32_0 : i32, i32
  }
  func.func @transform_6(%arg0: i32) -> (i32, i32) {
    %c0_i32 = arith.constant 0 : i32
    %c0_i32_0 = arith.constant 0 : i32
    %c0_i32_1 = arith.constant 0 : i32
    return %c0_i32, %c0_i32_0 : i32, i32
  }
  func.func @transform_7(%arg0: i32) -> (i32, i32) {
    %c0_i32 = arith.constant 0 : i32
    %c0_i32_0 = arith.constant 0 : i32
    %c0_i32_1 = arith.constant 0 : i32
    return %c0_i32, %c0_i32_0 : i32, i32
  }
  func.func @transform_8(%arg0: i32) -> (i32, i32) {
    %c0_i32 = arith.constant 0 : i32
    %c0_i32_0 = arith.constant 0 : i32
    %c0_i32_1 = arith.constant 0 : i32
    return %c0_i32, %c0_i32_0 : i32, i32
  }
  func.func @transform_9(%arg0: i32) -> (i32, i32, i32) {
    %c0_i32 = arith.constant 0 : i32
    %c0_i32_0 = arith.constant 0 : i32
    %c0_i32_1 = arith.constant 0 : i32
    return %arg0, %c0_i32, %c0_i32_0 : i32, i32, i32
  }
}

</mosaic_0001>

<llo_original>
// kernel: tpu_custom_call.1
$region0: #{tpu_custom_call.1}
  #allocation0 [shape = 'u32[]', space=smem, size = 0x4, offset = 0x4, fixed_abs, tag = 'smem constant byte address 0x4 - core index']
  #allocation1 [shape = 'u32[144,128]{1,0:T(1,128)}', space=vmem, size = 0x12000, scoped, tag = 'internal scratch']
  #allocation2 [shape = 'f32[8,32]{1,0:T(8,128)}', space=vmem, size = 0x1000, scoped, tag = 'scratch operand']
  %s0 = inlined_call_operand.hbm [shape: bf16[2,8,32], index: 0, kind: input, shape index: {}]
  %s1 = inlined_call_operand.hbm [shape: bf16[32,32], index: 1, kind: input, shape index: {}]
  %s2 = inlined_call_operand.hbm [shape: bf16[32,32], index: 2, kind: input, shape index: {}]
  %s3 = inlined_call_operand.hbm [shape: bf16[32,32], index: 3, kind: input, shape index: {}]
  %s4 = inlined_call_operand.hbm [shape: bf16[32,32], index: 4, kind: input, shape index: {}]
  %s5 = inlined_call_operand.vmem [shape: f32[1,32], index: 5, kind: input, shape index: {}]
  %s6 = inlined_call_operand.vmem [shape: f32[1,32], index: 6, kind: input, shape index: {}]
  %s7 = inlined_call_operand.vmem [shape: f32[1,32], index: 7, kind: input, shape index: {}]
  %s8 = inlined_call_operand.vmem [shape: f32[1,32], index: 8, kind: input, shape index: {}]
  %s9 = inlined_call_operand.hbm [shape: f32[2,8,32], index: 9, kind: output, shape index: {}]
  %s10 = sld [smem:[#allocation0]]
  $region89: #{tpu_custom_call.1} parent=0
    _
  %s12 = ssub.s32 1, %s10
  %s13 = scalar_select 0, %s12, %s10
  $region1: #{tpu_custom_call.1} parent=0
    #allocation3 [shape = 'u8[4096]{0}', space=vmem, size = 0x1000, scoped, tag = 'input window, operand 0']
    #allocation4 [shape = 's32[2]{0}', space=sflag, size = 0x8, scoped, tag = 'scoped memory for tpu_custom_call.1']
    #allocation5 [shape = 's32[2]{0}', space=sflag, size = 0x8, scoped, tag = 'scoped memory for tpu_custom_call.1']
    #allocation6 [shape = 'u8[8192]{0}', space=vmem, size = 0x2000, scoped, tag = 'input window, operand 1, single buffered']
    #allocation7 [shape = 's32[1]{0}', space=sflag, size = 0x4, scoped, tag = 'scoped memory for tpu_custom_call.1']
    #allocation8 [shape = 'u8[8192]{0}', space=vmem, size = 0x2000, scoped, tag = 'input window, operand 2, single buffered']
    #allocation9 [shape = 'u8[8192]{0}', space=vmem, size = 0x2000, scoped, tag = 'input window, operand 3, single buffered']
    #allocation10 [shape = 's32[1]{0}', space=sflag, size = 0x4, scoped, tag = 'scoped memory for tpu_custom_call.1']
    #allocation11 [shape = 'u8[8192]{0}', space=vmem, size = 0x2000, scoped, tag = 'input window, operand 4, single buffered']
    #allocation12 [shape = 'u8[8192]{0}', space=vmem, size = 0x2000, scoped, tag = 'output window, operand 0']
    %14 = vsyncpa [#allocation4], 0
    %s15 = scalar_lea.sflag [#allocation4], 1
    %16 = vsyncpa %s15, 0
    %17 = vsyncpa [#allocation7], 0
    %18 = vsyncpa [#allocation10], 0
    %19 = vsyncpa [#allocation5], 0
    %s20 = scalar_lea.sflag [#allocation5], 1
    %21 = vsyncpa %s20, 0
    loop: start=0, step=1, limit=4
    $region2: #{tpu_custom_call.1} parent=1 // loop_pre_header
      _
    $region3: #{tpu_custom_call.1} parent=1 // loop_header
      %s23 = sphi 0, %s27
      %p24 = scmp.ge.s32.totalorder %s23, 4
      %s33 = sphi 0, %s35
      %s36 = sphi 0, %s33
      %s37 = sphi 0, %s36
      %s53 = sphi 0, %s37
      %s57 = sphi 0, %s57
      %s59 = sphi 0, %s57
      %s60 = sphi 0, %s59
      %s74 = sphi 0, %s60
      %s78 = sphi 0, %s78
      %s80 = sphi 0, %s78
      %s81 = sphi 0, %s80
      %s95 = sphi 0, %s81
      %s99 = sphi 0, %s99
      %s101 = sphi 0, %s99
      %s102 = sphi 0, %s101
      %s116 = sphi 0, %s102
      %s120 = sphi 0, %s120
      %s122 = sphi 0, %s120
      %s123 = sphi 0, %s122
      %s137 = sphi 0, %s123
      %s141 = sphi 0, %s141
      %s143 = sphi 0, %s141
      %s144 = sphi 0, %s143
      %s158 = sphi 0, %s144
      %s162 = sphi 0, %s162
      %s164 = sphi 0, %s162
      %s165 = sphi 0, %s164
      %s179 = sphi 0, %s165
      %s183 = sphi 0, %s183
      %s185 = sphi 0, %s183
      %s186 = sphi 0, %s185
      %s200 = sphi 0, %s186
      %s204 = sphi 0, %s204
      %s206 = sphi 0, %s204
      %s207 = sphi 0, %s206
      %s221 = sphi 0, %s207
      %s227 = sphi 0, %s229
      %s230 = sphi 0, %s227
      %s231 = sphi 0, %s230
      %s247 = sphi 0, %s231
    $region4: #{tpu_custom_call.1} parent=1 // loop_header_branch
      %26 = sbr.rel (%p24) target = $region8
    $region5: #{tpu_custom_call.1} parent=1 // loop_body
      %s28 = ssub.s32 %s23, 1
      %s29 = ssub.s32 %s23, 2
      %s30 = sadd.s32 %s23, 1
      %s31 = ssub.s32 %s23, %s30
      %p32 = scmp.eq.s32.totalorder %s31, 0
      %s34 = sadd.s32 %s33, 1
      %s35 = scalar_select %p32, %s33, %s34
      %p38 = pneg %p32
      %p39 = scmp.eq.s32.totalorder %s23, 1
      %p40 = por %p38, %p39
      %p41 = scmp.ne.s32.totalorder %s33, %s36
      %p42 = scmp.eq.s32.totalorder %s23, 0
      %p43 = por %p41, %p42
      %p44 = scmp.ne.s32.totalorder %s33, %s36
      %p45 = scmp.eq.s32.totalorder %s28, 1
      %p46 = por %p44, %p45
      %p47 = scmp.ne.s32.totalorder %s36, %s37
      %p48 = scmp.eq.s32.totalorder %s28, 0
      %p49 = por %p47, %p48
      %p50 = scmp.ne.s32.totalorder %s36, %s37
      %p51 = scmp.eq.s32.totalorder %s29, 1
      %p52 = por %p50, %p51
      %p54 = scmp.ne.s32.totalorder %s37, %s53
      %p55 = scmp.eq.s32.totalorder %s29, 0
      %p56 = por %p54, %p55
      %s58 = sadd.s32 %s57, 1
      %p61 = scmp.eq.s32.totalorder %s23, 1
      %p62 = scmp.ne.s32.totalorder %s57, %s59
      %p63 = scmp.eq.s32.totalorder %s23, 0
      %p64 = por %p62, %p63
      %p65 = scmp.ne.s32.totalorder %s57, %s59
      %p66 = scmp.eq.s32.totalorder %s28, 1
      %p67 = por %p65, %p66
      %p68 = scmp.ne.s32.totalorder %s59, %s60
      %p69 = scmp.eq.s32.totalorder %s28, 0
      %p70 = por %p68, %p69
      %p71 = scmp.ne.s32.totalorder %s59, %s60
      %p72 = scmp.eq.s32.totalorder %s29, 1
      %p73 = por %p71, %p72
      %p75 = scmp.ne.s32.totalorder %s60, %s74
      %p76 = scmp.eq.s32.totalorder %s29, 0
      %p77 = por %p75, %p76
      %s79 = sadd.s32 %s78, 1
      %p82 = scmp.eq.s32.totalorder %s23, 1
      %p83 = scmp.ne.s32.totalorder %s78, %s80
      %p84 = scmp.eq.s32.totalorder %s23, 0
      %p85 = por %p83, %p84
      %p86 = scmp.ne.s32.totalorder %s78, %s80
      %p87 = scmp.eq.s32.totalorder %s28, 1
      %p88 = por %p86, %p87
      %p89 = scmp.ne.s32.totalorder %s80, %s81
      %p90 = scmp.eq.s32.totalorder %s28, 0
      %p91 = por %p89, %p90
      %p92 = scmp.ne.s32.totalorder %s80, %s81
      %p93 = scmp.eq.s32.totalorder %s29, 1
      %p94 = por %p92, %p93
      %p96 = scmp.ne.s32.totalorder %s81, %s95
      %p97 = scmp.eq.s32.totalorder %s29, 0
      %p98 = por %p96, %p97
      %s100 = sadd.s32 %s99, 1
      %p103 = scmp.eq.s32.totalorder %s23, 1
      %p104 = scmp.ne.s32.totalorder %s99, %s101
      %p105 = scmp.eq.s32.totalorder %s23, 0
      %p106 = por %p104, %p105
      %p107 = scmp.ne.s32.totalorder %s99, %s101
      %p108 = scmp.eq.s32.totalorder %s28, 1
      %p109 = por %p107, %p108
      %p110 = scmp.ne.s32.totalorder %s101, %s102
      %p111 = scmp.eq.s32.totalorder %s28, 0
      %p112 = por %p110, %p111
      %p113 = scmp.ne.s32.totalorder %s101, %s102
      %p114 = scmp.eq.s32.totalorder %s29, 1
      %p115 = por %p113, %p114
      %p117 = scmp.ne.s32.totalorder %s102, %s116
      %p118 = scmp.eq.s32.totalorder %s29, 0
      %p119 = por %p117, %p118
      %s121 = sadd.s32 %s120, 1
      %p124 = scmp.eq.s32.totalorder %s23, 1
      %p125 = scmp.ne.s32.totalorder %s120, %s122
      %p126 = scmp.eq.s32.totalorder %s23, 0
      %p127 = por %p125, %p126
      %p128 = scmp.ne.s32.totalorder %s120, %s122
      %p129 = scmp.eq.s32.totalorder %s28, 1
      %p130 = por %p128, %p129
      %p131 = scmp.ne.s32.totalorder %s122, %s123
      %p132 = scmp.eq.s32.totalorder %s28, 0
      %p133 = por %p131, %p132
      %p134 = scmp.ne.s32.totalorder %s122, %s123
      %p135 = scmp.eq.s32.totalorder %s29, 1
      %p136 = por %p134, %p135
      %p138 = scmp.ne.s32.totalorder %s123, %s137
      %p139 = scmp.eq.s32.totalorder %s29, 0
      %p140 = por %p138, %p139
      %s142 = sadd.s32 %s141, 1
      %p145 = scmp.eq.s32.totalorder %s23, 1
      %p146 = scmp.ne.s32.totalorder %s141, %s143
      %p147 = scmp.eq.s32.totalorder %s23, 0
      %p148 = por %p146, %p147
      %p149 = scmp.ne.s32.totalorder %s141, %s143
      %p150 = scmp.eq.s32.totalorder %s28, 1
      %p151 = por %p149, %p150
      %p152 = scmp.ne.s32.totalorder %s143, %s144
      %p153 = scmp.eq.s32.totalorder %s28, 0
      %p154 = por %p152, %p153
      %p155 = scmp.ne.s32.totalorder %s143, %s144
      %p156 = scmp.eq.s32.totalorder %s29, 1
      %p157 = por %p155, %p156
      %p159 = scmp.ne.s32.totalorder %s144, %s158
      %p160 = scmp.eq.s32.totalorder %s29, 0
      %p161 = por %p159, %p160
      %s163 = sadd.s32 %s162, 1
      %p166 = scmp.eq.s32.totalorder %s23, 1
      %p167 = scmp.ne.s32.totalorder %s162, %s164
      %p168 = scmp.eq.s32.totalorder %s23, 0
      %p169 = por %p167, %p168
      %p170 = scmp.ne.s32.totalorder %s162, %s164
      %p171 = scmp.eq.s32.totalorder %s28, 1
      %p172 = por %p170, %p171
      %p173 = scmp.ne.s32.totalorder %s164, %s165
      %p174 = scmp.eq.s32.totalorder %s28, 0
      %p175 = por %p173, %p174
      %p176 = scmp.ne.s32.totalorder %s164, %s165
      %p177 = scmp.eq.s32.totalorder %s29, 1
      %p178 = por %p176, %p177
      %p180 = scmp.ne.s32.totalorder %s165, %s179
      %p181 = scmp.eq.s32.totalorder %s29, 0
      %p182 = por %p180, %p181
      %s184 = sadd.s32 %s183, 1
      %p187 = scmp.eq.s32.totalorder %s23, 1
      %p188 = scmp.ne.s32.totalorder %s183, %s185
      %p189 = scmp.eq.s32.totalorder %s23, 0
      %p190 = por %p188, %p189
      %p191 = scmp.ne.s32.totalorder %s183, %s185
      %p192 = scmp.eq.s32.totalorder %s28, 1
      %p193 = por %p191, %p192
      %p194 = scmp.ne.s32.totalorder %s185, %s186
      %p195 = scmp.eq.s32.totalorder %s28, 0
      %p196 = por %p194, %p195
      %p197 = scmp.ne.s32.totalorder %s185, %s186
      %p198 = scmp.eq.s32.totalorder %s29, 1
      %p199 = por %p197, %p198
      %p201 = scmp.ne.s32.totalorder %s186, %s200
      %p202 = scmp.eq.s32.totalorder %s29, 0
      %p203 = por %p201, %p202
      %s205 = sadd.s32 %s204, 1
      %p208 = scmp.eq.s32.totalorder %s23, 1
      %p209 = scmp.ne.s32.totalorder %s204, %s206
      %p210 = scmp.eq.s32.totalorder %s23, 0
      %p211 = por %p209, %p210
      %p212 = scmp.ne.s32.totalorder %s204, %s206
      %p213 = scmp.eq.s32.totalorder %s28, 1
      %p214 = por %p212, %p213
      %p215 = scmp.ne.s32.totalorder %s206, %s207
      %p216 = scmp.eq.s32.totalorder %s28, 0
      %p217 = por %p215, %p216
      %p218 = scmp.ne.s32.totalorder %s206, %s207
      %p219 = scmp.eq.s32.totalorder %s29, 1
      %p220 = por %p218, %p219
      %p222 = scmp.ne.s32.totalorder %s207, %s221
      %p223 = scmp.eq.s32.totalorder %s29, 0
      %p224 = por %p222, %p223
      %s225 = ssub.s32 %s23, %s30
      %p226 = scmp.eq.s32.totalorder %s225, 0
      %s228 = sadd.s32 %s227, 1
      %s229 = scalar_select %p226, %s227, %s228
      %p232 = pneg %p226
      %p233 = scmp.eq.s32.totalorder %s23, 1
      %p234 = por %p232, %p233
      %p235 = scmp.ne.s32.totalorder %s227, %s230
      %p236 = scmp.eq.s32.totalorder %s23, 0
      %p237 = por %p235, %p236
      %p238 = scmp.ne.s32.totalorder %s227, %s230
      %p239 = scmp.eq.s32.totalorder %s28, 1
      %p240 = por %p238, %p239
      %p241 = scmp.ne.s32.totalorder %s230, %s231
      %p242 = scmp.eq.s32.totalorder %s28, 0
      %p243 = por %p241, %p242
      %p244 = scmp.ne.s32.totalorder %s230, %s231
      %p245 = scmp.eq.s32.totalorder %s29, 1
      %p246 = por %p244, %p245
      %p248 = scmp.ne.s32.totalorder %s231, %s247
      %p249 = scmp.eq.s32.totalorder %s29, 0
      %p250 = por %p248, %p249
      %p251 = scmp.le.s32.totalorder 1, %s23
      %p252 = scmp.lt.s32.totalorder %s23, 3
      %p253 = pnand %p251, %p252
      %p254 = pneg %p253
      // Predicated region
      $region9: #{tpu_custom_call.1} parent=5 // pred_check
        _
      $region10: #{tpu_custom_call.1} parent=5 // pred_check_branch
        %256 = sbr.rel (%p253) target = $region12
      $region11: #{tpu_custom_call.1} parent=5 // pred_region
        %s257 = ssub.s32 %s23, 1
        // Predicated region
        $region13: #{tpu_custom_call.1} parent=11 // pred_check
          %p258 = pneg %p70
        $region14: #{tpu_custom_call.1} parent=11 // pred_check_branch
          %260 = sbr.rel (%p258) target = $region16
        $region15: #{tpu_custom_call.1} parent=11 // pred_region
          %s262 = ssub.s32 256, 256
          %263 = vsyncadd [#allocation7], %s262
          %s264 = sshll.u32 [#allocation6], 4
          %s265 = int_to_ptr.vmem [resolvable:$true] %s264
          %270 = dma.hbm_to_vmem [thread:$0]  %s1, 256, %s265, [#allocation7], 64, 64, 4
        $region16: #{tpu_custom_call.1} parent=11 // pred_fallthru
          _
        // Predicated region
        $region17: #{tpu_custom_call.1} parent=11 // pred_check
          %p271 = pneg %p91
        $region18: #{tpu_custom_call.1} parent=11 // pred_check_branch
          %273 = sbr.rel (%p271) target = $region20
        $region19: #{tpu_custom_call.1} parent=11 // pred_region
          %s275 = ssub.s32 256, 256
          %276 = vsyncadd [#allocation7], %s275
          %s277 = sshll.u32 [#allocation8], 4
          %s278 = int_to_ptr.vmem [resolvable:$true] %s277
          %283 = dma.hbm_to_vmem [thread:$0]  %s2, 256, %s278, [#allocation7], 64, 64, 4
        $region20: #{tpu_custom_call.1} parent=11 // pred_fallthru
          _
        // Predicated region
        $region21: #{tpu_custom_call.1} parent=11 // pred_check
          %p284 = pneg %p112
        $region22: #{tpu_custom_call.1} parent=11 // pred_check_branch
          %286 = sbr.rel (%p284) target = $region24
        $region23: #{tpu_custom_call.1} parent=11 // pred_region
          %s288 = ssub.s32 256, 256
          %289 = vsyncadd [#allocation10], %s288
          %s290 = sshll.u32 [#allocation9], 4
          %s291 = int_to_ptr.vmem [resolvable:$true] %s290
          %296 = dma.hbm_to_vmem [thread:$0]  %s3, 256, %s291, [#allocation10], 64, 64, 4
        $region24: #{tpu_custom_call.1} parent=11 // pred_fallthru
          _
        // Predicated region
        $region25: #{tpu_custom_call.1} parent=11 // pred_check
          %p297 = pneg %p133
        $region26: #{tpu_custom_call.1} parent=11 // pred_check_branch
          %299 = sbr.rel (%p297) target = $region28
        $region27: #{tpu_custom_call.1} parent=11 // pred_region
          %s301 = ssub.s32 256, 256
          %302 = vsyncadd [#allocation10], %s301
          %s303 = sshll.u32 [#allocation11], 4
          %s304 = int_to_ptr.vmem [resolvable:$true] %s303
          %309 = dma.hbm_to_vmem [thread:$0]  %s4, 256, %s304, [#allocation10], 64, 64, 4
        $region28: #{tpu_custom_call.1} parent=11 // pred_fallthru
          _
        // Predicated region
        $region29: #{tpu_custom_call.1} parent=11 // pred_check
          %p310 = pneg %p154
        $region30: #{tpu_custom_call.1} parent=11 // pred_check_branch
          %312 = sbr.rel (%p310) target = $region32
        $region31: #{tpu_custom_call.1} parent=11 // pred_region
          _
        $region32: #{tpu_custom_call.1} parent=11 // pred_fallthru
          _
        // Predicated region
        $region33: #{tpu_custom_call.1} parent=11 // pred_check
          %p313 = pneg %p175
        $region34: #{tpu_custom_call.1} parent=11 // pred_check_branch
          %315 = sbr.rel (%p313) target = $region36
        $region35: #{tpu_custom_call.1} parent=11 // pred_region
          _
        $region36: #{tpu_custom_call.1} parent=11 // pred_fallthru
          _
        // Predicated region
        $region37: #{tpu_custom_call.1} parent=11 // pred_check
          %p316 = pneg %p196
        $region38: #{tpu_custom_call.1} parent=11 // pred_check_branch
          %318 = sbr.rel (%p316) target = $region40
        $region39: #{tpu_custom_call.1} parent=11 // pred_region
          _
        $region40: #{tpu_custom_call.1} parent=11 // pred_fallthru
          _
        // Predicated region
        $region41: #{tpu_custom_call.1} parent=11 // pred_check
          %p319 = pneg %p217
        $region42: #{tpu_custom_call.1} parent=11 // pred_check_branch
          %321 = sbr.rel (%p319) target = $region44
        $region43: #{tpu_custom_call.1} parent=11 // pred_region
          _
        $region44: #{tpu_custom_call.1} parent=11 // pred_fallthru
          _
      $region12: #{tpu_custom_call.1} parent=5 // pred_fallthru
        _
      %p322 = scmp.lt.s32.totalorder %s23, 2
      // Predicated region
      $region45: #{tpu_custom_call.1} parent=5 // pred_check
        %p323 = pneg %p322
      $region46: #{tpu_custom_call.1} parent=5 // pred_check_branch
        %325 = sbr.rel (%p323) target = $region48
      $region47: #{tpu_custom_call.1} parent=5 // pred_region
        // Predicated region
        $region49: #{tpu_custom_call.1} parent=47 // pred_check
          %p326 = pneg %p43
        $region50: #{tpu_custom_call.1} parent=47 // pred_check_branch
          %328 = sbr.rel (%p326) target = $region52
        $region51: #{tpu_custom_call.1} parent=47 // pred_region
          %s329 = sand.u32 %s33, 1
          %s330 = scalar_lea.sflag [#allocation4], %s329
          %s331 = sand.u32 %s33, 1
          %s332 = smul.addr %s331, 4
          %s333 = scalar_lea.vmem [#allocation3], %s332
          %s335 = ssub.s32 64, 64
          %336 = vsyncadd %s330, %s335
          %s337 = smul.addr %s23, 64
          %s338 = scalar_lea.hbm %s0, %s337
          %s340 = sshll.u32 %s333, 4
          %s341 = int_to_ptr.vmem [resolvable:$true] %s340
          %343 = dma.hbm_to_vmem [thread:$0]  %s338, 64, %s341, %s330
        $region52: #{tpu_custom_call.1} parent=47 // pred_fallthru
          _
      $region48: #{tpu_custom_call.1} parent=5 // pred_fallthru
        _
      %p344 = scmp.le.s32.totalorder 1, %s23
      %p345 = scmp.lt.s32.totalorder %s23, 3
      %p346 = pnand %p344, %p345
      %p347 = pneg %p346
      // Predicated region
      $region53: #{tpu_custom_call.1} parent=5 // pred_check
        _
      $region54: #{tpu_custom_call.1} parent=5 // pred_check_branch
        %349 = sbr.rel (%p346) target = $region56
      $region55: #{tpu_custom_call.1} parent=5 // pred_region
        %s350 = ssub.s32 %s23, 1
        %s351 = sand.u32 %s36, 1
        %s352 = scalar_lea.sflag [#allocation4], %s351
        %s353 = sand.u32 %s36, 1
        %s354 = smul.addr %s353, 4
        %s355 = scalar_lea.vmem [#allocation3], %s354
        // Predicated region
        $region57: #{tpu_custom_call.1} parent=55 // pred_check
          %p356 = pneg %p49
        $region58: #{tpu_custom_call.1} parent=55 // pred_check_branch
          %358 = sbr.rel (%p356) target = $region60
        $region59: #{tpu_custom_call.1} parent=55 // pred_region
          %359 = dma.done %s352, 64
        $region60: #{tpu_custom_call.1} parent=55 // pred_fallthru
          _
        // Predicated region
        $region61: #{tpu_custom_call.1} parent=55 // pred_check
          %p360 = pneg %p70
        $region62: #{tpu_custom_call.1} parent=55 // pred_check_branch
          %362 = sbr.rel (%p360) target = $region64
        $region63: #{tpu_custom_call.1} parent=55 // pred_region
          %363 = dma.done [#allocation7], 256
        $region64: #{tpu_custom_call.1} parent=55 // pred_fallthru
          _
        // Predicated region
        $region65: #{tpu_custom_call.1} parent=55 // pred_check
          %p364 = pneg %p91
        $region66: #{tpu_custom_call.1} parent=55 // pred_check_branch
          %366 = sbr.rel (%p364) target = $region68
        $region67: #{tpu_custom_call.1} parent=55 // pred_region
          %367 = dma.done [#allocation7], 256
        $region68: #{tpu_custom_call.1} parent=55 // pred_fallthru
          _
        // Predicated region
        $region69: #{tpu_custom_call.1} parent=55 // pred_check
          %p368 = pneg %p112
        $region70: #{tpu_custom_call.1} parent=55 // pred_check_branch
          %370 = sbr.rel (%p368) target = $region72
        $region71: #{tpu_custom_call.1} parent=55 // pred_region
          %371 = dma.done [#allocation10], 256
        $region72: #{tpu_custom_call.1} parent=55 // pred_fallthru
          _
        // Predicated region
        $region73: #{tpu_custom_call.1} parent=55 // pred_check
          %p372 = pneg %p133
        $region74: #{tpu_custom_call.1} parent=55 // pred_check_branch
          %374 = sbr.rel (%p372) target = $region76
        $region75: #{tpu_custom_call.1} parent=55 // pred_region
          %375 = dma.done [#allocation10], 256
        $region76: #{tpu_custom_call.1} parent=55 // pred_fallthru
          _
        %s376 = sand.u32 %s36, 1
        %s377 = scalar_lea.sflag [#allocation4], %s376
        %s378 = sand.u32 %s36, 1
        %s379 = smul.addr %s378, 4
        %s380 = scalar_lea.vmem [#allocation3], %s379
        %p381 = pneg %p49
        %p382 = pneg %p46
        %p383 = pneg %p70
        %p384 = pneg %p67
        %p385 = pneg %p91
        %p386 = pneg %p88
        %p387 = pneg %p112
        %p388 = pneg %p109
        %p389 = pneg %p133
        %p390 = pneg %p130
        %p391 = pneg %p154
        %p392 = pneg %p151
        %p393 = pneg %p175
        %p394 = pneg %p172
        %p395 = pneg %p196
        %p396 = pneg %p193
        %p397 = pneg %p217
        %p398 = pneg %p214
        %p399 = pneg %p243
        %p400 = pneg %p240
        %s401 = sand.u32 %s230, 1
        %s402 = scalar_lea.sflag [#allocation5], %s401
        %s403 = sand.u32 %s230, 1
        %s404 = smul.addr %s403, 8
        %s405 = scalar_lea.vmem [#allocation12], %s404
        %v407 = vld [vmem:[%s355] sm:$0xf]
        %v408 = vld [vmem:[#allocation6] sm:$0xf]
        %v409 = vld [vmem:[#allocation6 + $0x4] sm:$0xf]
        %v410 = vld [vmem:[#allocation6 + $0x8] sm:$0xf]
        %v411 = vld [vmem:[#allocation6 + $0xc] sm:$0xf]
        %v412 = vld [vmem:[%s5] sm:$0x1]
        %v414 = vlaneseq
        %v415 = vshrl.u32 %v414, 7
        %v416 = vsub.s32 0, %v415
        %v417 = vrot.slane %v412, %v416
        %v423 = vunpack.c.l.b16 %v408
        %v424 = vunpack.c.l.b16 %v409
        %v425 = vunpack.c.l.b16 %v410
        %v426 = vunpack.c.l.b16 %v411
        %v427 = vpack.c.b16 %v424, %v423
        %v428 = vpack.c.b16 %v426, %v425
        %vm431 = vcmask 261120
        %v433 = vsel %vm431, %v407, 0
        %435 = vmatprep.subr.bf16.mxu0 0
        %436 = vmatpush1.bf16.msra.mxu0 %v427
        %437 = vmatprep.subr.bf16.mxu0 0
        %438 = vmatpush1.bf16.msra.mxu0 %v428
        %439 = vmatprep.subr.bf16.mxu0 0
        %440 = vmatpush1.bf16.msra.mxu0 0
        %441 = vmatprep.subr.bf16.mxu0 0
        %442 = vmatpush1.bf16.msra.mxu0 0
        %443 = vmatprep.subr.bf16.mxu0 0
        %444 = vmatpush1.bf16.msra.mxu0 0
        %445 = vmatprep.subr.bf16.mxu0 0
        %446 = vmatpush1.bf16.msra.mxu0 0
        %447 = vmatprep.subr.bf16.mxu0 0
        %448 = vmatpush1.bf16.msra.mxu0 0
        %449 = vmatprep.subr.bf16.mxu0 0
        %450 = vmatpush1.bf16.msra.mxu0 0
        %451 = vmatprep.subr.bf16.mxu0 0
        %452 = vmatpush1.bf16.msra.mxu0 0
        %453 = vmatprep.subr.bf16.mxu0 0
        %454 = vmatpush1.bf16.msra.mxu0 0
        %455 = vmatprep.subr.bf16.mxu0 0
        %456 = vmatpush1.bf16.msra.mxu0 0
        %457 = vmatprep.subr.bf16.mxu0 0
        %458 = vmatpush1.bf16.msra.mxu0 0
        %459 = vmatprep.subr.bf16.mxu0 0
        %460 = vmatpush1.bf16.msra.mxu0 0
        %461 = vmatprep.subr.bf16.mxu0 0
        %462 = vmatpush1.bf16.msra.mxu0 0
        %463 = vmatprep.subr.bf16.mxu0 0
        %464 = vmatpush1.bf16.msra.mxu0 0
        %465 = vmatprep.subr.bf16.mxu0 0
        %466 = vmatpush1.bf16.msra.mxu0 0
        %467 = vmatprep.mubr.bf16.mxu0 0
        %468 = vmatmul.mubr.bf16.gmra.mrb[0].mxu0 %v433
        %v469 = vpop.f32.mrb[0].mxu0
        %v470 = vadd.f32 %v417, %v469
        %v471 = vpop.f32.mrb[0].mxu0
        %v472 = vpop.f32.mrb[0].mxu0
        %v473 = vpop.f32.mrb[0].mxu0
        %474 = vdwg.mxu0
        %v475 = vld [vmem:[#allocation8] sm:$0xf]
        %v476 = vld [vmem:[#allocation8 + $0x4] sm:$0xf]
        %v477 = vld [vmem:[#allocation8 + $0x8] sm:$0xf]
        %v478 = vld [vmem:[#allocation8 + $0xc] sm:$0xf]
        %v479 = vld [vmem:[%s6] sm:$0x1]
        %v481 = vlaneseq
        %v482 = vshrl.u32 %v481, 7
        %v483 = vsub.s32 0, %v482
        %v484 = vrot.slane %v479, %v483
        %v490 = vunpack.c.l.b16 %v475
        %v491 = vunpack.c.l.b16 %v476
        %v492 = vunpack.c.l.b16 %v477
        %v493 = vunpack.c.l.b16 %v478
        %v494 = vpack.c.b16 %v491, %v490
        %v495 = vpack.c.b16 %v493, %v492
        %498 = vmatprep.subr.bf16.mxu0 0
        %499 = vmatpush1.bf16.msra.mxu0 %v494
        %500 = vmatprep.subr.bf16.mxu0 0
        %501 = vmatpush1.bf16.msra.mxu0 %v495
        %502 = vmatprep.subr.bf16.mxu0 0
        %503 = vmatpush1.bf16.msra.mxu0 0
        %504 = vmatprep.subr.bf16.mxu0 0
        %505 = vmatpush1.bf16.msra.mxu0 0
        %506 = vmatprep.subr.bf16.mxu0 0
        %507 = vmatpush1.bf16.msra.mxu0 0
        %508 = vmatprep.subr.bf16.mxu0 0
        %509 = vmatpush1.bf16.msra.mxu0 0
        %510 = vmatprep.subr.bf16.mxu0 0
        %511 = vmatpush1.bf16.msra.mxu0 0
        %512 = vmatprep.subr.bf16.mxu0 0
        %513 = vmatpush1.bf16.msra.mxu0 0
        %514 = vmatprep.subr.bf16.mxu0 0
        %515 = vmatpush1.bf16.msra.mxu0 0
        %516 = vmatprep.subr.bf16.mxu0 0
        %517 = vmatpush1.bf16.msra.mxu0 0
        %518 = vmatprep.subr.bf16.mxu0 0
        %519 = vmatpush1.bf16.msra.mxu0 0
        %520 = vmatprep.subr.bf16.mxu0 0
        %521 = vmatpush1.bf16.msra.mxu0 0
        %522 = vmatprep.subr.bf16.mxu0 0
        %523 = vmatpush1.bf16.msra.mxu0 0
        %524 = vmatprep.subr.bf16.mxu0 0
        %525 = vmatpush1.bf16.msra.mxu0 0
        %526 = vmatprep.subr.bf16.mxu0 0
        %527 = vmatpush1.bf16.msra.mxu0 0
        %528 = vmatprep.subr.bf16.mxu0 0
        %529 = vmatpush1.bf16.msra.mxu0 0
        %530 = vmatprep.mubr.bf16.mxu0 0
        %531 = vmatmul.mubr.bf16.gmra.mrb[0].mxu0 %v433
        %v532 = vpop.f32.mrb[0].mxu0
        %v533 = vadd.f32 %v484, %v532
        %v534 = vpop.f32.mrb[0].mxu0
        %v535 = vpop.f32.mrb[0].mxu0
        %v536 = vpop.f32.mrb[0].mxu0
        %537 = vdwg.mxu0
        %v538 = vld [vmem:[#allocation9] sm:$0xf]
        %v539 = vld [vmem:[#allocation9 + $0x4] sm:$0xf]
        %v540 = vld [vmem:[#allocation9 + $0x8] sm:$0xf]
        %v541 = vld [vmem:[#allocation9 + $0xc] sm:$0xf]
        %v542 = vld [vmem:[%s7] sm:$0x1]
        %v544 = vlaneseq
        %v545 = vshrl.u32 %v544, 7
        %v546 = vsub.s32 0, %v545
        %v547 = vrot.slane %v542, %v546
        %v553 = vunpack.c.l.b16 %v538
        %v554 = vunpack.c.l.b16 %v539
        %v555 = vunpack.c.l.b16 %v540
        %v556 = vunpack.c.l.b16 %v541
        %v557 = vpack.c.b16 %v554, %v553
        %v558 = vpack.c.b16 %v556, %v555
        %561 = vmatprep.subr.bf16.mxu0 0
        %562 = vmatpush1.bf16.msra.mxu0 %v557
        %563 = vmatprep.subr.bf16.mxu0 0
        %564 = vmatpush1.bf16.msra.mxu0 %v558
        %565 = vmatprep.subr.bf16.mxu0 0
        %566 = vmatpush1.bf16.msra.mxu0 0
        %567 = vmatprep.subr.bf16.mxu0 0
        %568 = vmatpush1.bf16.msra.mxu0 0
        %569 = vmatprep.subr.bf16.mxu0 0
        %570 = vmatpush1.bf16.msra.mxu0 0
        %571 = vmatprep.subr.bf16.mxu0 0
        %572 = vmatpush1.bf16.msra.mxu0 0
        %573 = vmatprep.subr.bf16.mxu0 0
        %574 = vmatpush1.bf16.msra.mxu0 0
        %575 = vmatprep.subr.bf16.mxu0 0
        %576 = vmatpush1.bf16.msra.mxu0 0
        %577 = vmatprep.subr.bf16.mxu0 0
        %578 = vmatpush1.bf16.msra.mxu0 0
        %579 = vmatprep.subr.bf16.mxu0 0
        %580 = vmatpush1.bf16.msra.mxu0 0
        %581 = vmatprep.subr.bf16.mxu0 0
        %582 = vmatpush1.bf16.msra.mxu0 0
        %583 = vmatprep.subr.bf16.mxu0 0
        %584 = vmatpush1.bf16.msra.mxu0 0
        %585 = vmatprep.subr.bf16.mxu0 0
        %586 = vmatpush1.bf16.msra.mxu0 0
        %587 = vmatprep.subr.bf16.mxu0 0
        %588 = vmatpush1.bf16.msra.mxu0 0
        %589 = vmatprep.subr.bf16.mxu0 0
        %590 = vmatpush1.bf16.msra.mxu0 0
        %591 = vmatprep.subr.bf16.mxu0 0
        %592 = vmatpush1.bf16.msra.mxu0 0
        %593 = vmatprep.mubr.bf16.mxu0 0
        %594 = vmatmul.mubr.bf16.gmra.mrb[0].mxu0 %v433
        %v595 = vpop.f32.mrb[0].mxu0
        %v596 = vadd.f32 %v547, %v595
        %v597 = vpop.f32.mrb[0].mxu0
        %v598 = vpop.f32.mrb[0].mxu0
        %v599 = vpop.f32.mrb[0].mxu0
        %600 = vdwg.mxu0
        %v601 = vmul.f32 %v470, 0.35355338
        %v602 = vpack.c.bf16 %v601, %v601
        %v603 = vpack.c.bf16 %v533, %v533
        %v604 = vpack.c.bf16 %v596, %v596
        %vm605 = vcmask 64512
        %v607 = vsel %vm605, %v602, 0
        %v610 = vsel %vm605, %v603, 0
        %612 = vmatprep.subr.bf16.mxu0 0
        %613 = vmatpush1.bf16.xpose.msra.mxu0 %v610
        %614 = vmatprep.subr.bf16.mxu0 0
        %615 = vmatpush1.bf16.xpose.msra.mxu0 0
        %616 = vmatprep.subr.bf16.mxu0 0
        %617 = vmatpush1.bf16.xpose.msra.mxu0 0
        %618 = vmatprep.subr.bf16.mxu0 0
        %619 = vmatpush1.bf16.xpose.msra.mxu0 0
        %620 = vmatprep.subr.bf16.mxu0 0
        %621 = vmatpush1.bf16.xpose.msra.mxu0 0
        %622 = vmatprep.subr.bf16.mxu0 0
        %623 = vmatpush1.bf16.xpose.msra.mxu0 0
        %624 = vmatprep.subr.bf16.mxu0 0
        %625 = vmatpush1.bf16.xpose.msra.mxu0 0
        %626 = vmatprep.subr.bf16.mxu0 0
        %627 = vmatpush1.bf16.xpose.msra.mxu0 0
        %628 = vmatprep.subr.bf16.mxu0 0
        %629 = vmatpush1.bf16.xpose.msra.mxu0 0
        %630 = vmatprep.subr.bf16.mxu0 0
        %631 = vmatpush1.bf16.xpose.msra.mxu0 0
        %632 = vmatprep.subr.bf16.mxu0 0
        %633 = vmatpush1.bf16.xpose.msra.mxu0 0
        %634 = vmatprep.subr.bf16.mxu0 0
        %635 = vmatpush1.bf16.xpose.msra.mxu0 0
        %636 = vmatprep.subr.bf16.mxu0 0
        %637 = vmatpush1.bf16.xpose.msra.mxu0 0
        %638 = vmatprep.subr.bf16.mxu0 0
        %639 = vmatpush1.bf16.xpose.msra.mxu0 0
        %640 = vmatprep.subr.bf16.mxu0 0
        %641 = vmatpush1.bf16.xpose.msra.mxu0 0
        %642 = vmatprep.subr.bf16.mxu0 0
        %643 = vmatpush1.bf16.xpose.msra.mxu0 0
        %644 = vmatprep.mubr.bf16.mxu0 0
        %645 = vmatmul.mubr.bf16.gmra.mrb[0].mxu0 %v607
        %v646 = vpop.f32.mrb[0].mxu0
        %v647 = vadd.f32 0.0, %v646
        %v648 = vpop.f32.mrb[0].mxu0
        %v649 = vpop.f32.mrb[0].mxu0
        %v650 = vpop.f32.mrb[0].mxu0
        %651 = vdwg.mxu0
        %v652 = vsel %vm605, %v647, -inf
        %653 = vmax.xlane.f32.xlu0 %v652
        %v654 = vpop.xlane.xlu0 %653
        %v655 = vsub.f32 %v647, %v654
        %v656 = vmul.f32 %v655, 1.442695
        %v657 = vpow.pop %v656
        %v658 = vsel %vm605, %v657, 0.0
        %659 = vadd.xlane.f32.xlu0 %v658
        %v660 = vpop.xlane.xlu0 %659
        %v661 = vrcp.pop %v660
        %v662 = vmul.f32 %v657, %v661
        %v663 = vpack.c.bf16 %v662, %v662
        %v665 = vsel %vm605, %v663, 0
        %vm667 = vcmask 1043456
        %v669 = vsel %vm667, %v604, 0
        %671 = vmatprep.subr.bf16.mxu0 0
        %672 = vmatpush1.bf16.msra.mxu0 %v669
        %673 = vmatprep.subr.bf16.mxu0 0
        %674 = vmatpush1.bf16.msra.mxu0 0
        %675 = vmatprep.subr.bf16.mxu0 0
        %676 = vmatpush1.bf16.msra.mxu0 0
        %677 = vmatprep.subr.bf16.mxu0 0
        %678 = vmatpush1.bf16.msra.mxu0 0
        %679 = vmatprep.subr.bf16.mxu0 0
        %680 = vmatpush1.bf16.msra.mxu0 0
        %681 = vmatprep.subr.bf16.mxu0 0
        %682 = vmatpush1.bf16.msra.mxu0 0
        %683 = vmatprep.subr.bf16.mxu0 0
        %684 = vmatpush1.bf16.msra.mxu0 0
        %685 = vmatprep.subr.bf16.mxu0 0
        %686 = vmatpush1.bf16.msra.mxu0 0
        %687 = vmatprep.subr.bf16.mxu0 0
        %688 = vmatpush1.bf16.msra.mxu0 0
        %689 = vmatprep.subr.bf16.mxu0 0
        %690 = vmatpush1.bf16.msra.mxu0 0
        %691 = vmatprep.subr.bf16.mxu0 0
        %692 = vmatpush1.bf16.msra.mxu0 0
        %693 = vmatprep.subr.bf16.mxu0 0
        %694 = vmatpush1.bf16.msra.mxu0 0
        %695 = vmatprep.subr.bf16.mxu0 0
        %696 = vmatpush1.bf16.msra.mxu0 0
        %697 = vmatprep.subr.bf16.mxu0 0
        %698 = vmatpush1.bf16.msra.mxu0 0
        %699 = vmatprep.subr.bf16.mxu0 0
        %700 = vmatpush1.bf16.msra.mxu0 0
        %701 = vmatprep.subr.bf16.mxu0 0
        %702 = vmatpush1.bf16.msra.mxu0 0
        %703 = vmatprep.mubr.bf16.mxu0 0
        %704 = vmatmul.mubr.bf16.gmra.mrb[0].mxu0 %v665
        %v705 = vpop.f32.mrb[0].mxu0
        %v706 = vadd.f32 0.0, %v705
        %v707 = vpop.f32.mrb[0].mxu0
        %v708 = vpop.f32.mrb[0].mxu0
        %v709 = vpop.f32.mrb[0].mxu0
        %710 = vdwg.mxu0
        %711 = vst.msk [vmem:[#allocation2] sm:$0xff] %vm605, %v706
        %713 = vrot.lane.b32.xlu0 %v602, 120
        %v714 = vpop.permute.xlu0 %713
        %716 = vrot.lane.b32.xlu0 %v603, 120
        %v717 = vpop.permute.xlu0 %716
        %v719 = vsel %vm605, %v714, 0
        %v722 = vsel %vm605, %v717, 0
        %724 = vmatprep.subr.bf16.mxu0 0
        %725 = vmatpush1.bf16.xpose.msra.mxu0 %v722
        %726 = vmatprep.subr.bf16.mxu0 0
        %727 = vmatpush1.bf16.xpose.msra.mxu0 0
        %728 = vmatprep.subr.bf16.mxu0 0
        %729 = vmatpush1.bf16.xpose.msra.mxu0 0
        %730 = vmatprep.subr.bf16.mxu0 0
        %731 = vmatpush1.bf16.xpose.msra.mxu0 0
        %732 = vmatprep.subr.bf16.mxu0 0
        %733 = vmatpush1.bf16.xpose.msra.mxu0 0
        %734 = vmatprep.subr.bf16.mxu0 0
        %735 = vmatpush1.bf16.xpose.msra.mxu0 0
        %736 = vmatprep.subr.bf16.mxu0 0
        %737 = vmatpush1.bf16.xpose.msra.mxu0 0
        %738 = vmatprep.subr.bf16.mxu0 0
        %739 = vmatpush1.bf16.xpose.msra.mxu0 0
        %740 = vmatprep.subr.bf16.mxu0 0
        %741 = vmatpush1.bf16.xpose.msra.mxu0 0
        %742 = vmatprep.subr.bf16.mxu0 0
        %743 = vmatpush1.bf16.xpose.msra.mxu0 0
        %744 = vmatprep.subr.bf16.mxu0 0
        %745 = vmatpush1.bf16.xpose.msra.mxu0 0
        %746 = vmatprep.subr.bf16.mxu0 0
        %747 = vmatpush1.bf16.xpose.msra.mxu0 0
        %748 = vmatprep.subr.bf16.mxu0 0
        %749 = vmatpush1.bf16.xpose.msra.mxu0 0
        %750 = vmatprep.subr.bf16.mxu0 0
        %751 = vmatpush1.bf16.xpose.msra.mxu0 0
        %752 = vmatprep.subr.bf16.mxu0 0
        %753 = vmatpush1.bf16.xpose.msra.mxu0 0
        %754 = vmatprep.subr.bf16.mxu0 0
        %755 = vmatpush1.bf16.xpose.msra.mxu0 0
        %756 = vmatprep.mubr.bf16.mxu0 0
        %757 = vmatmul.mubr.bf16.gmra.mrb[0].mxu0 %v719
        %v758 = vpop.f32.mrb[0].mxu0
        %v759 = vadd.f32 0.0, %v758
        %v760 = vpop.f32.mrb[0].mxu0
        %v761 = vpop.f32.mrb[0].mxu0
        %v762 = vpop.f32.mrb[0].mxu0
        %763 = vdwg.mxu0
        %v764 = vsel %vm605, %v759, -inf
        %765 = vmax.xlane.f32.xlu0 %v764
        %v766 = vpop.xlane.xlu0 %765
        %v767 = vsub.f32 %v759, %v766
        %v768 = vmul.f32 %v767, 1.442695
        %v769 = vpow.pop %v768
        %v770 = vsel %vm605, %v769, 0.0
        %771 = vadd.xlane.f32.xlu0 %v770
        %v772 = vpop.xlane.xlu0 %771
        %v773 = vrcp.pop %v772
        %v774 = vmul.f32 %v769, %v773
        %v775 = vpack.c.bf16 %v774, %v774
        %777 = vrot.lane.b32.xlu0 %v604, 120
        %v778 = vpop.permute.xlu0 %777
        %v780 = vsel %vm605, %v775, 0
        %v783 = vsel %vm667, %v778, 0
        %785 = vmatprep.subr.bf16.mxu0 0
        %786 = vmatpush1.bf16.msra.mxu0 %v783
        %787 = vmatprep.subr.bf16.mxu0 0
        %788 = vmatpush1.bf16.msra.mxu0 0
        %789 = vmatprep.subr.bf16.mxu0 0
        %790 = vmatpush1.bf16.msra.mxu0 0
        %791 = vmatprep.subr.bf16.mxu0 0
        %792 = vmatpush1.bf16.msra.mxu0 0
        %793 = vmatprep.subr.bf16.mxu0 0
        %794 = vmatpush1.bf16.msra.mxu0 0
        %795 = vmatprep.subr.bf16.mxu0 0
        %796 = vmatpush1.bf16.msra.mxu0 0
        %797 = vmatprep.subr.bf16.mxu0 0
        %798 = vmatpush1.bf16.msra.mxu0 0
        %799 = vmatprep.subr.bf16.mxu0 0
        %800 = vmatpush1.bf16.msra.mxu0 0
        %801 = vmatprep.subr.bf16.mxu0 0
        %802 = vmatpush1.bf16.msra.mxu0 0
        %803 = vmatprep.subr.bf16.mxu0 0
        %804 = vmatpush1.bf16.msra.mxu0 0
        %805 = vmatprep.subr.bf16.mxu0 0
        %806 = vmatpush1.bf16.msra.mxu0 0
        %807 = vmatprep.subr.bf16.mxu0 0
        %808 = vmatpush1.bf16.msra.mxu0 0
        %809 = vmatprep.subr.bf16.mxu0 0
        %810 = vmatpush1.bf16.msra.mxu0 0
        %811 = vmatprep.subr.bf16.mxu0 0
        %812 = vmatpush1.bf16.msra.mxu0 0
        %813 = vmatprep.subr.bf16.mxu0 0
        %814 = vmatpush1.bf16.msra.mxu0 0
        %815 = vmatprep.subr.bf16.mxu0 0
        %816 = vmatpush1.bf16.msra.mxu0 0
        %817 = vmatprep.mubr.bf16.mxu0 0
        %818 = vmatmul.mubr.bf16.gmra.mrb[0].mxu0 %v780
        %v819 = vpop.f32.mrb[0].mxu0
        %v820 = vadd.f32 0.0, %v819
        %v821 = vpop.f32.mrb[0].mxu0
        %v822 = vpop.f32.mrb[0].mxu0
        %v823 = vpop.f32.mrb[0].mxu0
        %824 = vdwg.mxu0
        %826 = vrot.lane.b32.xlu0 %v820, 8
        %v827 = vpop.permute.xlu0 %826
        %vm829 = vcmask 130112
        %830 = vst.msk [vmem:[#allocation2] sm:$0xff] %vm829, %v827
        %831 = vrot.lane.b32.xlu0 %v602, 112
        %v832 = vpop.permute.xlu0 %831
        %833 = vrot.lane.b32.xlu0 %v603, 112
        %v834 = vpop.permute.xlu0 %833
        %v836 = vsel %vm605, %v832, 0
        %v839 = vsel %vm605, %v834, 0
        %841 = vmatprep.subr.bf16.mxu0 0
        %842 = vmatpush1.bf16.xpose.msra.mxu0 %v839
        %843 = vmatprep.subr.bf16.mxu0 0
        %844 = vmatpush1.bf16.xpose.msra.mxu0 0
        %845 = vmatprep.subr.bf16.mxu0 0
        %846 = vmatpush1.bf16.xpose.msra.mxu0 0
        %847 = vmatprep.subr.bf16.mxu0 0
        %848 = vmatpush1.bf16.xpose.msra.mxu0 0
        %849 = vmatprep.subr.bf16.mxu0 0
        %850 = vmatpush1.bf16.xpose.msra.mxu0 0
        %851 = vmatprep.subr.bf16.mxu0 0
        %852 = vmatpush1.bf16.xpose.msra.mxu0 0
        %853 = vmatprep.subr.bf16.mxu0 0
        %854 = vmatpush1.bf16.xpose.msra.mxu0 0
        %855 = vmatprep.subr.bf16.mxu0 0
        %856 = vmatpush1.bf16.xpose.msra.mxu0 0
        %857 = vmatprep.subr.bf16.mxu0 0
        %858 = vmatpush1.bf16.xpose.msra.mxu0 0
        %859 = vmatprep.subr.bf16.mxu0 0
        %860 = vmatpush1.bf16.xpose.msra.mxu0 0
        %861 = vmatprep.subr.bf16.mxu0 0
        %862 = vmatpush1.bf16.xpose.msra.mxu0 0
        %863 = vmatprep.subr.bf16.mxu0 0
        %864 = vmatpush1.bf16.xpose.msra.mxu0 0
        %865 = vmatprep.subr.bf16.mxu0 0
        %866 = vmatpush1.bf16.xpose.msra.mxu0 0
        %867 = vmatprep.subr.bf16.mxu0 0
        %868 = vmatpush1.bf16.xpose.msra.mxu0 0
        %869 = vmatprep.subr.bf16.mxu0 0
        %870 = vmatpush1.bf16.xpose.msra.mxu0 0
        %871 = vmatprep.subr.bf16.mxu0 0
        %872 = vmatpush1.bf16.xpose.msra.mxu0 0
        %873 = vmatprep.mubr.bf16.mxu0 0
        %874 = vmatmul.mubr.bf16.gmra.mrb[0].mxu0 %v836
        %v875 = vpop.f32.mrb[0].mxu0
        %v876 = vadd.f32 0.0, %v875
        %v877 = vpop.f32.mrb[0].mxu0
        %v878 = vpop.f32.mrb[0].mxu0
        %v879 = vpop.f32.mrb[0].mxu0
        %880 = vdwg.mxu0
        %v881 = vsel %vm605, %v876, -inf
        %882 = vmax.xlane.f32.xlu0 %v881
        %v883 = vpop.xlane.xlu0 %882
        %v884 = vsub.f32 %v876, %v883
        %v885 = vmul.f32 %v884, 1.442695
        %v886 = vpow.pop %v885
        %v887 = vsel %vm605, %v886, 0.0
        %888 = vadd.xlane.f32.xlu0 %v887
        %v889 = vpop.xlane.xlu0 %888
        %v890 = vrcp.pop %v889
        %v891 = vmul.f32 %v886, %v890
        %v892 = vpack.c.bf16 %v891, %v891
        %893 = vrot.lane.b32.xlu0 %v604, 112
        %v894 = vpop.permute.xlu0 %893
        %v896 = vsel %vm605, %v892, 0
        %v899 = vsel %vm667, %v894, 0
        %901 = vmatprep.subr.bf16.mxu0 0
        %902 = vmatpush1.bf16.msra.mxu0 %v899
        %903 = vmatprep.subr.bf16.mxu0 0
        %904 = vmatpush1.bf16.msra.mxu0 0
        %905 = vmatprep.subr.bf16.mxu0 0
        %906 = vmatpush1.bf16.msra.mxu0 0
        %907 = vmatprep.subr.bf16.mxu0 0
        %908 = vmatpush1.bf16.msra.mxu0 0
        %909 = vmatprep.subr.bf16.mxu0 0
        %910 = vmatpush1.bf16.msra.mxu0 0
        %911 = vmatprep.subr.bf16.mxu0 0
        %912 = vmatpush1.bf16.msra.mxu0 0
        %913 = vmatprep.subr.bf16.mxu0 0
        %914 = vmatpush1.bf16.msra.mxu0 0
        %915 = vmatprep.subr.bf16.mxu0 0
        %916 = vmatpush1.bf16.msra.mxu0 0
        %917 = vmatprep.subr.bf16.mxu0 0
        %918 = vmatpush1.bf16.msra.mxu0 0
        %919 = vmatprep.subr.bf16.mxu0 0
        %920 = vmatpush1.bf16.msra.mxu0 0
        %921 = vmatprep.subr.bf16.mxu0 0
        %922 = vmatpush1.bf16.msra.mxu0 0
        %923 = vmatprep.subr.bf16.mxu0 0
        %924 = vmatpush1.bf16.msra.mxu0 0
        %925 = vmatprep.subr.bf16.mxu0 0
        %926 = vmatpush1.bf16.msra.mxu0 0
        %927 = vmatprep.subr.bf16.mxu0 0
        %928 = vmatpush1.bf16.msra.mxu0 0
        %929 = vmatprep.subr.bf16.mxu0 0
        %930 = vmatpush1.bf16.msra.mxu0 0
        %931 = vmatprep.subr.bf16.mxu0 0
        %932 = vmatpush1.bf16.msra.mxu0 0
        %933 = vmatprep.mubr.bf16.mxu0 0
        %934 = vmatmul.mubr.bf16.gmra.mrb[0].mxu0 %v896
        %v935 = vpop.f32.mrb[0].mxu0
        %v936 = vadd.f32 0.0, %v935
        %v937 = vpop.f32.mrb[0].mxu0
        %v938 = vpop.f32.mrb[0].mxu0
        %v939 = vpop.f32.mrb[0].mxu0
        %940 = vdwg.mxu0
        %942 = vrot.lane.b32.xlu0 %v936, 16
        %v943 = vpop.permute.xlu0 %942
        %vm945 = vcmask 195712
        %946 = vst.msk [vmem:[#allocation2] sm:$0xff] %vm945, %v943
        %947 = vrot.lane.b32.xlu0 %v602, 104
        %v948 = vpop.permute.xlu0 %947
        %949 = vrot.lane.b32.xlu0 %v603, 104
        %v950 = vpop.permute.xlu0 %949
        %v952 = vsel %vm605, %v948, 0
        %v955 = vsel %vm605, %v950, 0
        %957 = vmatprep.subr.bf16.mxu0 0
        %958 = vmatpush1.bf16.xpose.msra.mxu0 %v955
        %959 = vmatprep.subr.bf16.mxu0 0
        %960 = vmatpush1.bf16.xpose.msra.mxu0 0
        %961 = vmatprep.subr.bf16.mxu0 0
        %962 = vmatpush1.bf16.xpose.msra.mxu0 0
        %963 = vmatprep.subr.bf16.mxu0 0
        %964 = vmatpush1.bf16.xpose.msra.mxu0 0
        %965 = vmatprep.subr.bf16.mxu0 0
        %966 = vmatpush1.bf16.xpose.msra.mxu0 0
        %967 = vmatprep.subr.bf16.mxu0 0
        %968 = vmatpush1.bf16.xpose.msra.mxu0 0
        %969 = vmatprep.subr.bf16.mxu0 0
        %970 = vmatpush1.bf16.xpose.msra.mxu0 0
        %971 = vmatprep.subr.bf16.mxu0 0
        %972 = vmatpush1.bf16.xpose.msra.mxu0 0
        %973 = vmatprep.subr.bf16.mxu0 0
        %974 = vmatpush1.bf16.xpose.msra.mxu0 0
        %975 = vmatprep.subr.bf16.mxu0 0
        %976 = vmatpush1.bf16.xpose.msra.mxu0 0
        %977 = vmatprep.subr.bf16.mxu0 0
        %978 = vmatpush1.bf16.xpose.msra.mxu0 0
        %979 = vmatprep.subr.bf16.mxu0 0
        %980 = vmatpush1.bf16.xpose.msra.mxu0 0
        %981 = vmatprep.subr.bf16.mxu0 0
        %982 = vmatpush1.bf16.xpose.msra.mxu0 0
        %983 = vmatprep.subr.bf16.mxu0 0
        %984 = vmatpush1.bf16.xpose.msra.mxu0 0
        %985 = vmatprep.subr.bf16.mxu0 0
        %986 = vmatpush1.bf16.xpose.msra.mxu0 0
        %987 = vmatprep.subr.bf16.mxu0 0
        %988 = vmatpush1.bf16.xpose.msra.mxu0 0
        %989 = vmatprep.mubr.bf16.mxu0 0
        %990 = vmatmul.mubr.bf16.gmra.mrb[0].mxu0 %v952
        %v991 = vpop.f32.mrb[0].mxu0
        %v992 = vadd.f32 0.0, %v991
        %v993 = vpop.f32.mrb[0].mxu0
        %v994 = vpop.f32.mrb[0].mxu0
        %v995 = vpop.f32.mrb[0].mxu0
        %996 = vdwg.mxu0
        %v997 = vsel %vm605, %v992, -inf
        %998 = vmax.xlane.f32.xlu0 %v997
        %v999 = vpop.xlane.xlu0 %998
        %v1000 = vsub.f32 %v992, %v999
        %v1001 = vmul.f32 %v1000, 1.442695
        %v1002 = vpow.pop %v1001
        %v1003 = vsel %vm605, %v1002, 0.0
        %1004 = vadd.xlane.f32.xlu0 %v1003
        %v1005 = vpop.xlane.xlu0 %1004
        %v1006 = vrcp.pop %v1005
        %v1007 = vmul.f32 %v1002, %v1006
        %v1008 = vpack.c.bf16 %v1007, %v1007
        %1009 = vrot.lane.b32.xlu0 %v604, 104
        %v1010 = vpop.permute.xlu0 %1009
        %v1012 = vsel %vm605, %v1008, 0
        %v1015 = vsel %vm667, %v1010, 0
        %1017 = vmatprep.subr.bf16.mxu0 0
        %1018 = vmatpush1.bf16.msra.mxu0 %v1015
        %1019 = vmatprep.subr.bf16.mxu0 0
        %1020 = vmatpush1.bf16.msra.mxu0 0
        %1021 = vmatprep.subr.bf16.mxu0 0
        %1022 = vmatpush1.bf16.msra.mxu0 0
        %1023 = vmatprep.subr.bf16.mxu0 0
        %1024 = vmatpush1.bf16.msra.mxu0 0
        %1025 = vmatprep.subr.bf16.mxu0 0
        %1026 = vmatpush1.bf16.msra.mxu0 0
        %1027 = vmatprep.subr.bf16.mxu0 0
        %1028 = vmatpush1.bf16.msra.mxu0 0
        %1029 = vmatprep.subr.bf16.mxu0 0
        %1030 = vmatpush1.bf16.msra.mxu0 0
        %1031 = vmatprep.subr.bf16.mxu0 0
        %1032 = vmatpush1.bf16.msra.mxu0 0
        %1033 = vmatprep.subr.bf16.mxu0 0
        %1034 = vmatpush1.bf16.msra.mxu0 0
        %1035 = vmatprep.subr.bf16.mxu0 0
        %1036 = vmatpush1.bf16.msra.mxu0 0
        %1037 = vmatprep.subr.bf16.mxu0 0
        %1038 = vmatpush1.bf16.msra.mxu0 0
        %1039 = vmatprep.subr.bf16.mxu0 0
        %1040 = vmatpush1.bf16.msra.mxu0 0
        %1041 = vmatprep.subr.bf16.mxu0 0
        %1042 = vmatpush1.bf16.msra.mxu0 0
        %1043 = vmatprep.subr.bf16.mxu0 0
        %1044 = vmatpush1.bf16.msra.mxu0 0
        %1045 = vmatprep.subr.bf16.mxu0 0
        %1046 = vmatpush1.bf16.msra.mxu0 0
        %1047 = vmatprep.subr.bf16.mxu0 0
        %1048 = vmatpush1.bf16.msra.mxu0 0
        %1049 = vmatprep.mubr.bf16.mxu0 0
        %1050 = vmatmul.mubr.bf16.gmra.mrb[0].mxu0 %v1012
        %v1051 = vpop.f32.mrb[0].mxu0
        %v1052 = vadd.f32 0.0, %v1051
        %v1053 = vpop.f32.mrb[0].mxu0
        %v1054 = vpop.f32.mrb[0].mxu0
        %v1055 = vpop.f32.mrb[0].mxu0
        %1056 = vdwg.mxu0
        %1058 = vrot.lane.b32.xlu0 %v1052, 24
        %v1059 = vpop.permute.xlu0 %1058
        %vm1061 = vcmask 261312
        %1062 = vst.msk [vmem:[#allocation2] sm:$0xff] %vm1061, %v1059
        %v1063 = vld [vmem:[#allocation2] sm:$0xff]
        %v1064 = vpack.c.bf16 %v1063, %v1063
        %v1065 = vld [vmem:[#allocation11] sm:$0xf]
        %v1066 = vld [vmem:[#allocation11 + $0x4] sm:$0xf]
        %v1067 = vld [vmem:[#allocation11 + $0x8] sm:$0xf]
        %v1068 = vld [vmem:[#allocation11 + $0xc] sm:$0xf]
        %v1069 = vld [vmem:[%s8] sm:$0x1]
        %v1071 = vlaneseq
        %v1072 = vshrl.u32 %v1071, 7
        %v1073 = vsub.s32 0, %v1072
        %v1074 = vrot.slane %v1069, %v1073
        %v1080 = vunpack.c.l.b16 %v1065
        %v1081 = vunpack.c.l.b16 %v1066
        %v1082 = vunpack.c.l.b16 %v1067
        %v1083 = vunpack.c.l.b16 %v1068
        %v1084 = vpack.c.b16 %v1081, %v1080
        %v1085 = vpack.c.b16 %v1083, %v1082
        %v1089 = vsel %vm431, %v1064, 0
        %1091 = vmatprep.subr.bf16.mxu0 0
        %1092 = vmatpush1.bf16.msra.mxu0 %v1084
        %1093 = vmatprep.subr.bf16.mxu0 0
        %1094 = vmatpush1.bf16.msra.mxu0 %v1085
        %1095 = vmatprep.subr.bf16.mxu0 0
        %1096 = vmatpush1.bf16.msra.mxu0 0
        %1097 = vmatprep.subr.bf16.mxu0 0
        %1098 = vmatpush1.bf16.msra.mxu0 0
        %1099 = vmatprep.subr.bf16.mxu0 0
        %1100 = vmatpush1.bf16.msra.mxu0 0
        %1101 = vmatprep.subr.bf16.mxu0 0
        %1102 = vmatpush1.bf16.msra.mxu0 0
        %1103 = vmatprep.subr.bf16.mxu0 0
        %1104 = vmatpush1.bf16.msra.mxu0 0
        %1105 = vmatprep.subr.bf16.mxu0 0
        %1106 = vmatpush1.bf16.msra.mxu0 0
        %1107 = vmatprep.subr.bf16.mxu0 0
        %1108 = vmatpush1.bf16.msra.mxu0 0
        %1109 = vmatprep.subr.bf16.mxu0 0
        %1110 = vmatpush1.bf16.msra.mxu0 0
        %1111 = vmatprep.subr.bf16.mxu0 0
        %1112 = vmatpush1.bf16.msra.mxu0 0
        %1113 = vmatprep.subr.bf16.mxu0 0
        %1114 = vmatpush1.bf16.msra.mxu0 0
        %1115 = vmatprep.subr.bf16.mxu0 0
        %1116 = vmatpush1.bf16.msra.mxu0 0
        %1117 = vmatprep.subr.bf16.mxu0 0
        %1118 = vmatpush1.bf16.msra.mxu0 0
        %1119 = vmatprep.subr.bf16.mxu0 0
        %1120 = vmatpush1.bf16.msra.mxu0 0
        %1121 = vmatprep.subr.bf16.mxu0 0
        %1122 = vmatpush1.bf16.msra.mxu0 0
        %1123 = vmatprep.mubr.bf16.mxu0 0
        %1124 = vmatmul.mubr.bf16.gmra.mrb[0].mxu0 %v1089
        %v1125 = vpop.f32.mrb[0].mxu0
        %v1126 = vadd.f32 %v1074, %v1125
        %v1127 = vpop.f32.mrb[0].mxu0
        %v1128 = vpop.f32.mrb[0].mxu0
        %v1129 = vpop.f32.mrb[0].mxu0
        %1130 = vdwg.mxu0
        %1131 = vst.msk [vmem:[%s405] sm:$0xff] %vm431, %v1126
        %s1132 = sand.u32 %s230, 1
        %s1133 = scalar_lea.sflag [#allocation5], %s1132
        %s1134 = sand.u32 %s230, 1
        %s1135 = smul.addr %s1134, 8
        %s1136 = scalar_lea.vmem [#allocation12], %s1135
        // Predicated region
        $region77: #{tpu_custom_call.1} parent=55 // pred_check
          %p1137 = pneg %p240
        $region78: #{tpu_custom_call.1} parent=55 // pred_check_branch
          %1139 = sbr.rel (%p1137) target = $region80
        $region79: #{tpu_custom_call.1} parent=55 // pred_region
          %s1141 = ssub.s32 128, 128
          %1142 = vsyncadd %s1133, %s1141
          %s1143 = smul.addr %s28, 128
          %s1144 = scalar_lea.hbm %s9, %s1143
          %s1146 = sshll.u32 %s1136, 4
          %s1147 = int_to_ptr.vmem [resolvable:$true] %s1146
          %1149 = dma.vmem_to_hbm [thread:$0]  %s1147, 128, %s1144, %s1133
        $region80: #{tpu_custom_call.1} parent=55 // pred_fallthru
          _
      $region56: #{tpu_custom_call.1} parent=5 // pred_fallthru
        _
      %p1150 = scmp.le.s32.totalorder 2, %s23
      // Predicated region
      $region81: #{tpu_custom_call.1} parent=5 // pred_check
        %p1151 = pneg %p1150
      $region82: #{tpu_custom_call.1} parent=5 // pred_check_branch
        %1153 = sbr.rel (%p1151) target = $region84
      $region83: #{tpu_custom_call.1} parent=5 // pred_region
        %s1154 = ssub.s32 %s23, 2
        // Predicated region
        $region85: #{tpu_custom_call.1} parent=83 // pred_check
          %p1155 = pneg %p246
        $region86: #{tpu_custom_call.1} parent=83 // pred_check_branch
          %1157 = sbr.rel (%p1155) target = $region88
        $region87: #{tpu_custom_call.1} parent=83 // pred_region
          %s1158 = sand.u32 %s231, 1
          %s1159 = scalar_lea.sflag [#allocation5], %s1158
          %s1160 = sand.u32 %s231, 1
          %s1161 = smul.addr %s1160, 8
          %s1162 = scalar_lea.vmem [#allocation12], %s1161
          %1163 = dma.done %s1159, 128
        $region88: #{tpu_custom_call.1} parent=83 // pred_fallthru
          _
      $region84: #{tpu_custom_call.1} parent=5 // pred_fallthru
        _
    $region6: #{tpu_custom_call.1} parent=1 // loop_footer
      %s27 = sadd.s32 1, %s23
    $region7: #{tpu_custom_call.1} parent=1 // loop_footer_branch
      %22 = sbr.rel target = $region3
    $region8: #{tpu_custom_call.1} parent=1 // loop_exit
      _
    %1164 = vsyncpa [#allocation4], 1
    %s1165 = scalar_lea.sflag [#allocation4], 1
    %1166 = vsyncpa %s1165, 1
    %1167 = vsyncpa [#allocation7], 1
    %1168 = vsyncpa [#allocation10], 1
    %1169 = vsyncpa [#allocation5], 1
    %s1170 = scalar_lea.sflag [#allocation5], 1
    %1171 = vsyncpa %s1170, 1

</llo_original>
